<compile_context>
chip_gen: v7x
topology: tpu7x:2x2x1
jax: 0.10.0
libtpu: 0.0.40
codegen_flags: <defaults>
</compile_context>

<pallas_src>
import functools

import jax
import jax.numpy as jnp
from jax.experimental import pallas as pl
from jax.experimental.pallas import tpu as pltpu


def _gelu_exact(v):
    # Exact (erf-based) GELU as in PyTorch nn.GELU(); erf via Abramowitz-Stegun 7.1.26
    # (|error| < 1.5e-7) so only exp / mul / add / select are required.
    z = v * jnp.float32(0.7071067811865476)
    a = jnp.abs(z)
    t = 1.0 / (1.0 + jnp.float32(0.3275911) * a)
    poly = t * (jnp.float32(0.254829592) + t * (jnp.float32(-0.284496736)
           + t * (jnp.float32(1.421413741) + t * (jnp.float32(-1.453152027)
           + t * jnp.float32(1.061405429)))))
    erf_abs = 1.0 - poly * jnp.exp(-(a * a))
    erf = jnp.where(z >= 0.0, erf_abs, -erf_abs)
    return 0.5 * v * (1.0 + erf)


def _upconv_kernel(H, W, x_ref, w1_ref, b1_ref, w2_ref, b2_ref, o_ref,
                   patch1_ref, y1_ref, z_ref, patch2_ref):
    # x_ref:  (1, Cin, (H+2)*P)  column-dilated, zero-padded input, P = 2W+2:
    #         x_ref[0, c, i*P + 1 + 2*j] == x[c, i, j]; every other entry is 0.
    # w1_ref: (2*Cin, 6*Cin)     fused row-subpixel ConvTranspose weights
    # b1_ref: (2*Cin, 1)         ConvTranspose bias, tiled per output-row parity
    # w2_ref: (Cout, 9*Cin)      Conv2d weights, tap-major / channel-minor
    # b2_ref: (Cout, 1)          Conv2d bias
    # o_ref:  (1, Cout, 2H*P)    output tile: flat NCHW with per-row pitch P
    Cin = x_ref.shape[1]
    P = 2 * W + 2
    TW = 2 * W
    L1 = H * P          # stage-1 lane extent: H coarse rows of pitch P
    L2 = 2 * H * P      # stage-2 lane extent: 2H fine rows of pitch P

    # ---- Stage 1: ConvTranspose2d(3, stride=2, pad=1, output_pad=1) + GELU ---------
    # Row parities are decomposed (sub-pixel); columns stay on the dilated fine grid,
    # so the result is already column-interleaved and never needs a lane interleave.
    for sy in (0, 1):          # coarse input-row shift
        for kw in range(3):    # fine-column tap
            s = sy * 3 + kw
            src = sy * P + kw
            patch1_ref[s * Cin:(s + 1) * Cin, :] = x_ref[0, :, src:src + L1]
    y1 = jnp.dot(w1_ref[...], patch1_ref[...], preferred_element_type=jnp.float32)
    # rows [0, Cin) = even output rows, rows [Cin, 2Cin) = odd output rows
    y1_ref[...] = _gelu_exact(y1 + b1_ref[...])

    # ---- Scatter the two row-parity planes into the zero-padded fine grid (VMEM) ----
    # z holds the GELU'd transposed-conv output with one zero row/column of padding on
    # every side (the 3x3 conv's zero padding), same pitch P.
    z_ref[...] = jnp.zeros_like(z_ref)
    for r in range(2 * H):               # fine output row r = 2*i + py
        i, py = r // 2, r % 2
        dst = (r + 1) * P + 1
        z_ref[:, dst:dst + TW] = y1_ref[py * Cin:(py + 1) * Cin, i * P:i * P + TW]

    # ---- Stage 2: Conv2d(3, pad=1) as one im2col matmul + GELU ----------------------
    for dh in range(3):
        for dw in range(3):
            s = dh * 3 + dw
            src = dh * P + dw
            patch2_ref[s * Cin:(s + 1) * Cin, :] = z_ref[:, src:src + L2]
    y2 = jnp.dot(w2_ref[...], patch2_ref[...], preferred_element_type=jnp.float32)
    o_ref[0] = _gelu_exact(y2 + b2_ref[...]).astype(o_ref.dtype)


def upconv_forward(x_nchw, wt, bt, w2, b2):
    """UpConv forward.
    x_nchw: (N, Cin, H, W); wt: (Cin, Cin, 3, 3) ConvTranspose2d weight (in, out, kh, kw);
    bt: (Cin,); w2: (Cout, Cin, 3, 3) Conv2d weight (out, in, kh, kw); b2: (Cout,).
    Returns (N, Cout, 2H, 2W).
    """
    N, Cin, H, W = x_nchw.shape
    Cout = w2.shape[0]
    P = 2 * W + 2
    L2 = 2 * H * P
    dtype = x_nchw.dtype

    # Column-dilated + padded input on the fine column grid (rows stay coarse):
    #   x_cg[n, c, i, 1 + 2*j] = x[n, c, i, j], zeros elsewhere; two extra zero rows at
    #   the bottom cover the odd-output-row taps at the image border.
    x_cg = jax.lax.pad(x_nchw.astype(jnp.float32), jnp.float32(0.0),
                       ((0, 0, 0), (0, 0, 0), (0, 2, 0), (1, 2, 1)))
    x_cg = x_cg.reshape(N, Cin, (H + 2) * P)

    # Fused row-subpixel ConvTranspose weights.  Output fine row 2i+py is a 3-tap
    # column conv over the dilated columns of coarse rows i (shift sy=0) and i+1
    # (shift sy=1) with the flipped transposed-conv kernel:
    #   py=0 uses kernel row kh=1 (sy=0); py=1 uses kh=0 (sy=0) and kh=2 (sy=1).
    wt32 = wt.astype(jnp.float32)
    w1 = jnp.zeros((2 * Cin, 6 * Cin), jnp.float32)
    for py, sy, kh in ((0, 0, 1), (1, 0, 0), (1, 1, 2)):
        for kw in range(3):
            blk = wt32[:, :, 2 - kh, 2 - kw].T     # (co, ci) = wt[ci, co, ...]^T
            col = (sy * 3 + kw) * Cin
            w1 = w1.at[py * Cin:(py + 1) * Cin, col:col + Cin].set(blk)
    b1 = jnp.concatenate([bt, bt]).astype(jnp.float32).reshape(2 * Cin, 1)

    # Conv2d weights as (Cout, 9*Cin), tap-major / channel-minor; bias as a column.
    w2m = jnp.transpose(w2, (0, 2, 3, 1)).reshape(Cout, 9 * Cin).astype(jnp.float32)
    b2c = b2.astype(jnp.float32).reshape(Cout, 1)

    out_p = pl.pallas_call(
        functools.partial(_upconv_kernel, H, W),
        out_shape=jax.ShapeDtypeStruct((N, Cout, L2), dtype),
        grid_spec=pltpu.PrefetchScalarGridSpec(
            num_scalar_prefetch=0,
            grid=(N,),
            in_specs=[
                pl.BlockSpec((1, Cin, (H + 2) * P), lambda n: (n, 0, 0)),
                pl.BlockSpec((2 * Cin, 6 * Cin), lambda n: (0, 0)),
                pl.BlockSpec((2 * Cin, 1), lambda n: (0, 0)),
                pl.BlockSpec((Cout, 9 * Cin), lambda n: (0, 0)),
                pl.BlockSpec((Cout, 1), lambda n: (0, 0)),
            ],
            out_specs=pl.BlockSpec((1, Cout, L2), lambda n: (n, 0, 0)),
            scratch_shapes=[
                pltpu.VMEM((6 * Cin, H * P), jnp.float32),        # stage-1 im2col
                pltpu.VMEM((2 * Cin, H * P), jnp.float32),        # stage-1 output (GELU)
                pltpu.VMEM((Cin, (2 * H + 3) * P), jnp.float32),  # padded fine-grid y1
                pltpu.VMEM((9 * Cin, L2), jnp.float32),           # stage-2 im2col
            ],
        ),
        compiler_params=pltpu.CompilerParams(
            dimension_semantics=("parallel",),
        ),
    )(x_cg, w1, b1, w2m, b2c)

    # Drop the per-row pitch padding (2 junk lanes per output row) and restore NCHW.
    return out_p.reshape(N, Cout, 2 * H, P)[:, :, :, :2 * W]


def _upconv_reference(x, wt, bt, w2, b2):
    # Pure-XLA reference. ConvTranspose2d(k3,s2,p1,op1) == regular conv over the
    # 2x-dilated input with (1, 2) edge padding and the flipped, in/out-swapped kernel.
    w_eq = jnp.transpose(jnp.flip(wt, axis=(2, 3)), (1, 0, 2, 3))
    y1 = jax.lax.conv_general_dilated(
        x, w_eq, window_strides=(1, 1), padding=((1, 2), (1, 2)),
        lhs_dilation=(2, 2), dimension_numbers=("NCHW", "OIHW", "NCHW"))
    y1 = jax.nn.gelu(y1 + bt.reshape(1, -1, 1, 1), approximate=False)
    y2 = jax.lax.conv_general_dilated(
        y1, w2, window_strides=(1, 1), padding=((1, 1), (1, 1)),
        dimension_numbers=("NCHW", "OIHW", "NCHW"))
    return jax.nn.gelu(y2 + b2.reshape(1, -1, 1, 1), approximate=False)


if __name__ == "__main__":
    in_channels, out_channels = 4, 8
    N, H, W = 2, 16, 16

    key = jax.random.PRNGKey(0)
    kx, k1, k2, k3, k4 = jax.random.split(key, 5)

    x = jax.random.normal(kx, (N, in_channels, H, W), jnp.float32)
    # ConvTranspose2d(in, in, 3): weight (in, out=in, 3, 3), bias (in,)
    wt = 0.1 * jax.random.normal(k1, (in_channels, in_channels, 3, 3), jnp.float32)
    bt = 0.1 * jax.random.normal(k2, (in_channels,), jnp.float32)
    # Conv2d(in, out, 3): weight (out, in, 3, 3), bias (out,)
    w2 = 0.1 * jax.random.normal(k3, (out_channels, in_channels, 3, 3), jnp.float32)
    b2 = 0.1 * jax.random.normal(k4, (out_channels,), jnp.float32)

    out = jax.block_until_ready(jax.jit(upconv_forward)(x, wt, bt, w2, b2))
    assert out.shape == (N, out_channels, 2 * H, 2 * W), out.shape

    ref = jax.block_until_ready(jax.jit(_upconv_reference)(x, wt, bt, w2, b2))
    max_err = float(jnp.max(jnp.abs(out - ref)))
    assert max_err < 3e-2, f"numerical mismatch vs XLA reference: {max_err}"

    print("KERNEL_OK")
</pallas_src>

<mosaic_0001>
module attributes {stable_mosaic.version = 11 : i64} {
  func.func @_upconv_kernel(%arg0: i32, %arg1: memref<1x4x612xf32, #tpu.memory_space<vmem>>, %arg2: memref<8x24xf32, #tpu.memory_space<vmem>>, %arg3: memref<8x1xf32, #tpu.memory_space<vmem>>, %arg4: memref<8x36xf32, #tpu.memory_space<vmem>>, %arg5: memref<8x1xf32, #tpu.memory_space<vmem>>, %arg6: memref<1x8x1088xf32, #tpu.memory_space<vmem>>, %arg7: memref<24x544xf32, #tpu.memory_space<vmem>>, %arg8: memref<8x544xf32, #tpu.memory_space<vmem>>, %arg9: memref<4x1190xf32, #tpu.memory_space<vmem>>, %arg10: memref<36x1088xf32, #tpu.memory_space<vmem>>) attributes {dimension_semantics = [#tpu.dimension_semantics<parallel>], iteration_bounds = array<i64: 2>, scalar_prefetch = 0 : i64, scratch_operands = 4 : i64, tpu.core_type = #tpu.core_type<tc>, window_params = [{transform_indices = @transform_0, window_bounds = array<i64: 1, 4, 612>}, {pipeline_mode = #tpu.pipeline_mode<synchronous>, transform_indices = @transform_1, window_bounds = array<i64: 8, 24>}, {pipeline_mode = #tpu.pipeline_mode<synchronous>, transform_indices = @transform_2, window_bounds = array<i64: 8, 1>}, {pipeline_mode = #tpu.pipeline_mode<synchronous>, transform_indices = @transform_3, window_bounds = array<i64: 8, 36>}, {pipeline_mode = #tpu.pipeline_mode<synchronous>, transform_indices = @transform_4, window_bounds = array<i64: 8, 1>}, {transform_indices = @transform_5, window_bounds = array<i64: 1, 8, 1088>}]} {
    %c0 = arith.constant 0 : index
    %c0_0 = arith.constant 0 : index
    %c0_1 = arith.constant 0 : index
    %0 = vector.load %arg1[%c0, %c0_0, %c0_1] : memref<1x4x612xf32, #tpu.memory_space<vmem>>, vector<1x4x544xf32>
    %1 = vector.shape_cast %0 : vector<1x4x544xf32> to vector<4x544xf32>
    %c0_2 = arith.constant 0 : index
    %c0_3 = arith.constant 0 : index
    %2 = vector.load %arg7[%c0_2, %c0_3] : memref<24x544xf32, #tpu.memory_space<vmem>>, vector<4x544xf32>
    tpu.vector_store %arg7[%c0_2, %c0_3], %1 {strides = array<i32>} : memref<24x544xf32, #tpu.memory_space<vmem>>, vector<4x544xf32>,
    %c0_4 = arith.constant 0 : index
    %c0_5 = arith.constant 0 : index
    %c1 = arith.constant 1 : index
    %3 = vector.load %arg1[%c0_4, %c0_5, %c1] : memref<1x4x612xf32, #tpu.memory_space<vmem>>, vector<1x4x544xf32>
    %4 = vector.shape_cast %3 : vector<1x4x544xf32> to vector<4x544xf32>
    %c4 = arith.constant 4 : index
    %c0_6 = arith.constant 0 : index
    %5 = vector.load %arg7[%c4, %c0_6] : memref<24x544xf32, #tpu.memory_space<vmem>>, vector<4x544xf32>
    tpu.vector_store %arg7[%c4, %c0_6], %4 {strides = array<i32>} : memref<24x544xf32, #tpu.memory_space<vmem>>, vector<4x544xf32>,
    %c0_7 = arith.constant 0 : index
    %c0_8 = arith.constant 0 : index
    %c2 = arith.constant 2 : index
    %6 = vector.load %arg1[%c0_7, %c0_8, %c2] : memref<1x4x612xf32, #tpu.memory_space<vmem>>, vector<1x4x544xf32>
    %7 = vector.shape_cast %6 : vector<1x4x544xf32> to vector<4x544xf32>
    %c8 = arith.constant 8 : index
    %c0_9 = arith.constant 0 : index
    %8 = vector.load %arg7[%c8, %c0_9] : memref<24x544xf32, #tpu.memory_space<vmem>>, vector<4x544xf32>
    tpu.vector_store %arg7[%c8, %c0_9], %7 {strides = array<i32>} : memref<24x544xf32, #tpu.memory_space<vmem>>, vector<4x544xf32>,
    %c0_10 = arith.constant 0 : index
    %c0_11 = arith.constant 0 : index
    %c34 = arith.constant 34 : index
    %9 = vector.load %arg1[%c0_10, %c0_11, %c34] : memref<1x4x612xf32, #tpu.memory_space<vmem>>, vector<1x4x544xf32>
    %10 = vector.shape_cast %9 : vector<1x4x544xf32> to vector<4x544xf32>
    %c12 = arith.constant 12 : index
    %c0_12 = arith.constant 0 : index
    %11 = vector.load %arg7[%c12, %c0_12] : memref<24x544xf32, #tpu.memory_space<vmem>>, vector<4x544xf32>
    tpu.vector_store %arg7[%c12, %c0_12], %10 {strides = array<i32>} : memref<24x544xf32, #tpu.memory_space<vmem>>, vector<4x544xf32>,
    %c0_13 = arith.constant 0 : index
    %c0_14 = arith.constant 0 : index
    %c35 = arith.constant 35 : index
    %12 = vector.load %arg1[%c0_13, %c0_14, %c35] : memref<1x4x612xf32, #tpu.memory_space<vmem>>, vector<1x4x544xf32>
    %13 = vector.shape_cast %12 : vector<1x4x544xf32> to vector<4x544xf32>
    %c16 = arith.constant 16 : index
    %c0_15 = arith.constant 0 : index
    %14 = vector.load %arg7[%c16, %c0_15] : memref<24x544xf32, #tpu.memory_space<vmem>>, vector<4x544xf32>
    tpu.vector_store %arg7[%c16, %c0_15], %13 {strides = array<i32>} : memref<24x544xf32, #tpu.memory_space<vmem>>, vector<4x544xf32>,
    %c0_16 = arith.constant 0 : index
    %c0_17 = arith.constant 0 : index
    %c36 = arith.constant 36 : index
    %15 = vector.load %arg1[%c0_16, %c0_17, %c36] : memref<1x4x612xf32, #tpu.memory_space<vmem>>, vector<1x4x544xf32>
    %16 = vector.shape_cast %15 : vector<1x4x544xf32> to vector<4x544xf32>
    %c20 = arith.constant 20 : index
    %c0_18 = arith.constant 0 : index
    %17 = vector.load %arg7[%c20, %c0_18] : memref<24x544xf32, #tpu.memory_space<vmem>>, vector<4x544xf32>
    tpu.vector_store %arg7[%c20, %c0_18], %16 {strides = array<i32>} : memref<24x544xf32, #tpu.memory_space<vmem>>, vector<4x544xf32>,
    %c0_19 = arith.constant 0 : index
    %c0_20 = arith.constant 0 : index
    %18 = vector.load %arg2[%c0_19, %c0_20] : memref<8x24xf32, #tpu.memory_space<vmem>>, vector<8x24xf32>
    %c0_21 = arith.constant 0 : index
    %c0_22 = arith.constant 0 : index
    %19 = vector.load %arg7[%c0_21, %c0_22] : memref<24x544xf32, #tpu.memory_space<vmem>>, vector<24x544xf32>
    %cst = arith.constant dense<0.000000e+00> : vector<8x544xf32>
    %20 = tpu.matmul %18, %19, %cst {dimension_numbers = #tpu.dot_dimension_numbers<[1], [0], [0], [1], [0, 0, 1, 1], [], []>} : vector<8x24xf32>, vector<24x544xf32>, vector<8x544xf32> -> vector<8x544xf32>
    %c0_23 = arith.constant 0 : index
    %c0_24 = arith.constant 0 : index
    %21 = vector.load %arg3[%c0_23, %c0_24] : memref<8x1xf32, #tpu.memory_space<vmem>>, vector<8x1xf32>
    %22 = vector.broadcast %21 : vector<8x1xf32> to vector<8x544xf32>
    %23 = arith.addf %20, %22 : vector<8x544xf32>
    %cst_25 = arith.constant 0.707106769 : f32
    %24 = vector.broadcast %cst_25 : f32 to vector<8x544xf32>
    %25 = arith.mulf %23, %24 : vector<8x544xf32>
    %26 = math.absf %25 : vector<8x544xf32>
    %cst_26 = arith.constant 0.327591091 : f32
    %27 = vector.broadcast %cst_26 : f32 to vector<8x544xf32>
    %28 = arith.mulf %27, %26 : vector<8x544xf32>
    %cst_27 = arith.constant 1.000000e+00 : f32
    %29 = vector.broadcast %cst_27 : f32 to vector<8x544xf32>
    %30 = arith.addf %29, %28 : vector<8x544xf32>
    %cst_28 = arith.constant 1.000000e+00 : f32
    %31 = vector.broadcast %cst_28 : f32 to vector<8x544xf32>
    %32 = arith.divf %31, %30 : vector<8x544xf32>
    %cst_29 = arith.constant 1.06140542 : f32
    %33 = vector.broadcast %cst_29 : f32 to vector<8x544xf32>
    %34 = arith.mulf %32, %33 : vector<8x544xf32>
    %cst_30 = arith.constant -1.45315206 : f32
    %35 = vector.broadcast %cst_30 : f32 to vector<8x544xf32>
    %36 = arith.addf %35, %34 : vector<8x544xf32>
    %37 = arith.mulf %32, %36 : vector<8x544xf32>
    %cst_31 = arith.constant 1.42141378 : f32
    %38 = vector.broadcast %cst_31 : f32 to vector<8x544xf32>
    %39 = arith.addf %38, %37 : vector<8x544xf32>
    %40 = arith.mulf %32, %39 : vector<8x544xf32>
    %cst_32 = arith.constant -0.284496725 : f32
    %41 = vector.broadcast %cst_32 : f32 to vector<8x544xf32>
    %42 = arith.addf %41, %40 : vector<8x544xf32>
    %43 = arith.mulf %32, %42 : vector<8x544xf32>
    %cst_33 = arith.constant 0.254829586 : f32
    %44 = vector.broadcast %cst_33 : f32 to vector<8x544xf32>
    %45 = arith.addf %44, %43 : vector<8x544xf32>
    %46 = arith.mulf %32, %45 : vector<8x544xf32>
    %47 = arith.mulf %26, %26 : vector<8x544xf32>
    %cst_34 = arith.constant 0.000000e+00 : f32
    %48 = vector.broadcast %cst_34 : f32 to vector<8x544xf32>
    %49 = arith.subf %48, %47 : vector<8x544xf32>
    %50 = math.exp %49 : vector<8x544xf32>
    %51 = arith.mulf %46, %50 : vector<8x544xf32>
    %cst_35 = arith.constant 1.000000e+00 : f32
    %52 = vector.broadcast %cst_35 : f32 to vector<8x544xf32>
    %53 = arith.subf %52, %51 : vector<8x544xf32>
    %cst_36 = arith.constant 0.000000e+00 : f32
    %54 = vector.broadcast %cst_36 : f32 to vector<8x544xf32>
    %55 = arith.cmpf oge, %25, %54 : vector<8x544xf32>
    %cst_37 = arith.constant 0.000000e+00 : f32
    %56 = vector.broadcast %cst_37 : f32 to vector<8x544xf32>
    %57 = arith.subf %56, %53 : vector<8x544xf32>
    %58 = arith.select %55, %53, %57 : vector<8x544xi1>, vector<8x544xf32>
    %cst_38 = arith.constant 5.000000e-01 : f32
    %59 = vector.broadcast %cst_38 : f32 to vector<8x544xf32>
    %60 = arith.mulf %59, %23 : vector<8x544xf32>
    %cst_39 = arith.constant 1.000000e+00 : f32
    %61 = vector.broadcast %cst_39 : f32 to vector<8x544xf32>
    %62 = arith.addf %61, %58 : vector<8x544xf32>
    %63 = arith.mulf %60, %62 : vector<8x544xf32>
    %c0_40 = arith.constant 0 : index
    %c0_41 = arith.constant 0 : index
    %64 = vector.load %arg8[%c0_40, %c0_41] : memref<8x544xf32, #tpu.memory_space<vmem>>, vector<8x544xf32>
    tpu.vector_store %arg8[%c0_40, %c0_41], %63 {strides = array<i32>} : memref<8x544xf32, #tpu.memory_space<vmem>>, vector<8x544xf32>,
    %cst_42 = arith.constant 0.000000e+00 : f32
    %65 = vector.broadcast %cst_42 : f32 to vector<4x1190xf32>
    %c0_43 = arith.constant 0 : index
    %c0_44 = arith.constant 0 : index
    %66 = vector.load %arg9[%c0_43, %c0_44] : memref<4x1190xf32, #tpu.memory_space<vmem>>, vector<4x1190xf32>
    tpu.vector_store %arg9[%c0_43, %c0_44], %65 {strides = array<i32>} : memref<4x1190xf32, #tpu.memory_space<vmem>>, vector<4x1190xf32>,
    %c0_45 = arith.constant 0 : index
    %c0_46 = arith.constant 0 : index
    %67 = vector.load %arg8[%c0_45, %c0_46] : memref<8x544xf32, #tpu.memory_space<vmem>>, vector<4x32xf32>
    %c0_47 = arith.constant 0 : index
    %c35_48 = arith.constant 35 : index
    %68 = vector.load %arg9[%c0_47, %c35_48] : memref<4x1190xf32, #tpu.memory_space<vmem>>, vector<4x32xf32>
    tpu.vector_store %arg9[%c0_47, %c35_48], %67 {strides = array<i32>} : memref<4x1190xf32, #tpu.memory_space<vmem>>, vector<4x32xf32>,
    %c4_49 = arith.constant 4 : index
    %c0_50 = arith.constant 0 : index
    %69 = vector.load %arg8[%c4_49, %c0_50] : memref<8x544xf32, #tpu.memory_space<vmem>>, vector<4x32xf32>
    %c0_51 = arith.constant 0 : index
    %c69 = arith.constant 69 : index
    %70 = vector.load %arg9[%c0_51, %c69] : memref<4x1190xf32, #tpu.memory_space<vmem>>, vector<4x32xf32>
    tpu.vector_store %arg9[%c0_51, %c69], %69 {strides = array<i32>} : memref<4x1190xf32, #tpu.memory_space<vmem>>, vector<4x32xf32>,
    %c0_52 = arith.constant 0 : index
    %c34_53 = arith.constant 34 : index
    %71 = vector.load %arg8[%c0_52, %c34_53] : memref<8x544xf32, #tpu.memory_space<vmem>>, vector<4x32xf32>
    %c0_54 = arith.constant 0 : index
    %c103 = arith.constant 103 : index
    %72 = vector.load %arg9[%c0_54, %c103] : memref<4x1190xf32, #tpu.memory_space<vmem>>, vector<4x32xf32>
    tpu.vector_store %arg9[%c0_54, %c103], %71 {strides = array<i32>} : memref<4x1190xf32, #tpu.memory_space<vmem>>, vector<4x32xf32>,
    %c4_55 = arith.constant 4 : index
    %c34_56 = arith.constant 34 : index
    %73 = vector.load %arg8[%c4_55, %c34_56] : memref<8x544xf32, #tpu.memory_space<vmem>>, vector<4x32xf32>
    %c0_57 = arith.constant 0 : index
    %c137 = arith.constant 137 : index
    %74 = vector.load %arg9[%c0_57, %c137] : memref<4x1190xf32, #tpu.memory_space<vmem>>, vector<4x32xf32>
    tpu.vector_store %arg9[%c0_57, %c137], %73 {strides = array<i32>} : memref<4x1190xf32, #tpu.memory_space<vmem>>, vector<4x32xf32>,
    %c0_58 = arith.constant 0 : index
    %c68 = arith.constant 68 : index
    %75 = vector.load %arg8[%c0_58, %c68] : memref<8x544xf32, #tpu.memory_space<vmem>>, vector<4x32xf32>
    %c0_59 = arith.constant 0 : index
    %c171 = arith.constant 171 : index
    %76 = vector.load %arg9[%c0_59, %c171] : memref<4x1190xf32, #tpu.memory_space<vmem>>, vector<4x32xf32>
    tpu.vector_store %arg9[%c0_59, %c171], %75 {strides = array<i32>} : memref<4x1190xf32, #tpu.memory_space<vmem>>, vector<4x32xf32>,
    %c4_60 = arith.constant 4 : index
    %c68_61 = arith.constant 68 : index
    %77 = vector.load %arg8[%c4_60, %c68_61] : memref<8x544xf32, #tpu.memory_space<vmem>>, vector<4x32xf32>
    %c0_62 = arith.constant 0 : index
    %c205 = arith.constant 205 : index
    %78 = vector.load %arg9[%c0_62, %c205] : memref<4x1190xf32, #tpu.memory_space<vmem>>, vector<4x32xf32>
    tpu.vector_store %arg9[%c0_62, %c205], %77 {strides = array<i32>} : memref<4x1190xf32, #tpu.memory_space<vmem>>, vector<4x32xf32>,
    %c0_63 = arith.constant 0 : index
    %c102 = arith.constant 102 : index
    %79 = vector.load %arg8[%c0_63, %c102] : memref<8x544xf32, #tpu.memory_space<vmem>>, vector<4x32xf32>
    %c0_64 = arith.constant 0 : index
    %c239 = arith.constant 239 : index
    %80 = vector.load %arg9[%c0_64, %c239] : memref<4x1190xf32, #tpu.memory_space<vmem>>, vector<4x32xf32>
    tpu.vector_store %arg9[%c0_64, %c239], %79 {strides = array<i32>} : memref<4x1190xf32, #tpu.memory_space<vmem>>, vector<4x32xf32>,
    %c4_65 = arith.constant 4 : index
    %c102_66 = arith.constant 102 : index
    %81 = vector.load %arg8[%c4_65, %c102_66] : memref<8x544xf32, #tpu.memory_space<vmem>>, vector<4x32xf32>
    %c0_67 = arith.constant 0 : index
    %c273 = arith.constant 273 : index
    %82 = vector.load %arg9[%c0_67, %c273] : memref<4x1190xf32, #tpu.memory_space<vmem>>, vector<4x32xf32>
    tpu.vector_store %arg9[%c0_67, %c273], %81 {strides = array<i32>} : memref<4x1190xf32, #tpu.memory_space<vmem>>, vector<4x32xf32>,
    %c0_68 = arith.constant 0 : index
    %c136 = arith.constant 136 : index
    %83 = vector.load %arg8[%c0_68, %c136] : memref<8x544xf32, #tpu.memory_space<vmem>>, vector<4x32xf32>
    %c0_69 = arith.constant 0 : index
    %c307 = arith.constant 307 : index
    %84 = vector.load %arg9[%c0_69, %c307] : memref<4x1190xf32, #tpu.memory_space<vmem>>, vector<4x32xf32>
    tpu.vector_store %arg9[%c0_69, %c307], %83 {strides = array<i32>} : memref<4x1190xf32, #tpu.memory_space<vmem>>, vector<4x32xf32>,
    %c4_70 = arith.constant 4 : index
    %c136_71 = arith.constant 136 : index
    %85 = vector.load %arg8[%c4_70, %c136_71] : memref<8x544xf32, #tpu.memory_space<vmem>>, vector<4x32xf32>
    %c0_72 = arith.constant 0 : index
    %c341 = arith.constant 341 : index
    %86 = vector.load %arg9[%c0_72, %c341] : memref<4x1190xf32, #tpu.memory_space<vmem>>, vector<4x32xf32>
    tpu.vector_store %arg9[%c0_72, %c341], %85 {strides = array<i32>} : memref<4x1190xf32, #tpu.memory_space<vmem>>, vector<4x32xf32>,
    %c0_73 = arith.constant 0 : index
    %c170 = arith.constant 170 : index
    %87 = vector.load %arg8[%c0_73, %c170] : memref<8x544xf32, #tpu.memory_space<vmem>>, vector<4x32xf32>
    %c0_74 = arith.constant 0 : index
    %c375 = arith.constant 375 : index
    %88 = vector.load %arg9[%c0_74, %c375] : memref<4x1190xf32, #tpu.memory_space<vmem>>, vector<4x32xf32>
    tpu.vector_store %arg9[%c0_74, %c375], %87 {strides = array<i32>} : memref<4x1190xf32, #tpu.memory_space<vmem>>, vector<4x32xf32>,
    %c4_75 = arith.constant 4 : index
    %c170_76 = arith.constant 170 : index
    %89 = vector.load %arg8[%c4_75, %c170_76] : memref<8x544xf32, #tpu.memory_space<vmem>>, vector<4x32xf32>
    %c0_77 = arith.constant 0 : index
    %c409 = arith.constant 409 : index
    %90 = vector.load %arg9[%c0_77, %c409] : memref<4x1190xf32, #tpu.memory_space<vmem>>, vector<4x32xf32>
    tpu.vector_store %arg9[%c0_77, %c409], %89 {strides = array<i32>} : memref<4x1190xf32, #tpu.memory_space<vmem>>, vector<4x32xf32>,
    %c0_78 = arith.constant 0 : index
    %c204 = arith.constant 204 : index
    %91 = vector.load %arg8[%c0_78, %c204] : memref<8x544xf32, #tpu.memory_space<vmem>>, vector<4x32xf32>
    %c0_79 = arith.constant 0 : index
    %c443 = arith.constant 443 : index
    %92 = vector.load %arg9[%c0_79, %c443] : memref<4x1190xf32, #tpu.memory_space<vmem>>, vector<4x32xf32>
    tpu.vector_store %arg9[%c0_79, %c443], %91 {strides = array<i32>} : memref<4x1190xf32, #tpu.memory_space<vmem>>, vector<4x32xf32>,
    %c4_80 = arith.constant 4 : index
    %c204_81 = arith.constant 204 : index
    %93 = vector.load %arg8[%c4_80, %c204_81] : memref<8x544xf32, #tpu.memory_space<vmem>>, vector<4x32xf32>
    %c0_82 = arith.constant 0 : index
    %c477 = arith.constant 477 : index
    %94 = vector.load %arg9[%c0_82, %c477] : memref<4x1190xf32, #tpu.memory_space<vmem>>, vector<4x32xf32>
    tpu.vector_store %arg9[%c0_82, %c477], %93 {strides = array<i32>} : memref<4x1190xf32, #tpu.memory_space<vmem>>, vector<4x32xf32>,
    %c0_83 = arith.constant 0 : index
    %c238 = arith.constant 238 : index
    %95 = vector.load %arg8[%c0_83, %c238] : memref<8x544xf32, #tpu.memory_space<vmem>>, vector<4x32xf32>
    %c0_84 = arith.constant 0 : index
    %c511 = arith.constant 511 : index
    %96 = vector.load %arg9[%c0_84, %c511] : memref<4x1190xf32, #tpu.memory_space<vmem>>, vector<4x32xf32>
    tpu.vector_store %arg9[%c0_84, %c511], %95 {strides = array<i32>} : memref<4x1190xf32, #tpu.memory_space<vmem>>, vector<4x32xf32>,
    %c4_85 = arith.constant 4 : index
    %c238_86 = arith.constant 238 : index
    %97 = vector.load %arg8[%c4_85, %c238_86] : memref<8x544xf32, #tpu.memory_space<vmem>>, vector<4x32xf32>
    %c0_87 = arith.constant 0 : index
    %c545 = arith.constant 545 : index
    %98 = vector.load %arg9[%c0_87, %c545] : memref<4x1190xf32, #tpu.memory_space<vmem>>, vector<4x32xf32>
    tpu.vector_store %arg9[%c0_87, %c545], %97 {strides = array<i32>} : memref<4x1190xf32, #tpu.memory_space<vmem>>, vector<4x32xf32>,
    %c0_88 = arith.constant 0 : index
    %c272 = arith.constant 272 : index
    %99 = vector.load %arg8[%c0_88, %c272] : memref<8x544xf32, #tpu.memory_space<vmem>>, vector<4x32xf32>
    %c0_89 = arith.constant 0 : index
    %c579 = arith.constant 579 : index
    %100 = vector.load %arg9[%c0_89, %c579] : memref<4x1190xf32, #tpu.memory_space<vmem>>, vector<4x32xf32>
    tpu.vector_store %arg9[%c0_89, %c579], %99 {strides = array<i32>} : memref<4x1190xf32, #tpu.memory_space<vmem>>, vector<4x32xf32>,
    %c4_90 = arith.constant 4 : index
    %c272_91 = arith.constant 272 : index
    %101 = vector.load %arg8[%c4_90, %c272_91] : memref<8x544xf32, #tpu.memory_space<vmem>>, vector<4x32xf32>
    %c0_92 = arith.constant 0 : index
    %c613 = arith.constant 613 : index
    %102 = vector.load %arg9[%c0_92, %c613] : memref<4x1190xf32, #tpu.memory_space<vmem>>, vector<4x32xf32>
    tpu.vector_store %arg9[%c0_92, %c613], %101 {strides = array<i32>} : memref<4x1190xf32, #tpu.memory_space<vmem>>, vector<4x32xf32>,
    %c0_93 = arith.constant 0 : index
    %c306 = arith.constant 306 : index
    %103 = vector.load %arg8[%c0_93, %c306] : memref<8x544xf32, #tpu.memory_space<vmem>>, vector<4x32xf32>
    %c0_94 = arith.constant 0 : index
    %c647 = arith.constant 647 : index
    %104 = vector.load %arg9[%c0_94, %c647] : memref<4x1190xf32, #tpu.memory_space<vmem>>, vector<4x32xf32>
    tpu.vector_store %arg9[%c0_94, %c647], %103 {strides = array<i32>} : memref<4x1190xf32, #tpu.memory_space<vmem>>, vector<4x32xf32>,
    %c4_95 = arith.constant 4 : index
    %c306_96 = arith.constant 306 : index
    %105 = vector.load %arg8[%c4_95, %c306_96] : memref<8x544xf32, #tpu.memory_space<vmem>>, vector<4x32xf32>
    %c0_97 = arith.constant 0 : index
    %c681 = arith.constant 681 : index
    %106 = vector.load %arg9[%c0_97, %c681] : memref<4x1190xf32, #tpu.memory_space<vmem>>, vector<4x32xf32>
    tpu.vector_store %arg9[%c0_97, %c681], %105 {strides = array<i32>} : memref<4x1190xf32, #tpu.memory_space<vmem>>, vector<4x32xf32>,
    %c0_98 = arith.constant 0 : index
    %c340 = arith.constant 340 : index
    %107 = vector.load %arg8[%c0_98, %c340] : memref<8x544xf32, #tpu.memory_space<vmem>>, vector<4x32xf32>
    %c0_99 = arith.constant 0 : index
    %c715 = arith.constant 715 : index
    %108 = vector.load %arg9[%c0_99, %c715] : memref<4x1190xf32, #tpu.memory_space<vmem>>, vector<4x32xf32>
    tpu.vector_store %arg9[%c0_99, %c715], %107 {strides = array<i32>} : memref<4x1190xf32, #tpu.memory_space<vmem>>, vector<4x32xf32>,
    %c4_100 = arith.constant 4 : index
    %c340_101 = arith.constant 340 : index
    %109 = vector.load %arg8[%c4_100, %c340_101] : memref<8x544xf32, #tpu.memory_space<vmem>>, vector<4x32xf32>
    %c0_102 = arith.constant 0 : index
    %c749 = arith.constant 749 : index
    %110 = vector.load %arg9[%c0_102, %c749] : memref<4x1190xf32, #tpu.memory_space<vmem>>, vector<4x32xf32>
    tpu.vector_store %arg9[%c0_102, %c749], %109 {strides = array<i32>} : memref<4x1190xf32, #tpu.memory_space<vmem>>, vector<4x32xf32>,
    %c0_103 = arith.constant 0 : index
    %c374 = arith.constant 374 : index
    %111 = vector.load %arg8[%c0_103, %c374] : memref<8x544xf32, #tpu.memory_space<vmem>>, vector<4x32xf32>
    %c0_104 = arith.constant 0 : index
    %c783 = arith.constant 783 : index
    %112 = vector.load %arg9[%c0_104, %c783] : memref<4x1190xf32, #tpu.memory_space<vmem>>, vector<4x32xf32>
    tpu.vector_store %arg9[%c0_104, %c783], %111 {strides = array<i32>} : memref<4x1190xf32, #tpu.memory_space<vmem>>, vector<4x32xf32>,
    %c4_105 = arith.constant 4 : index
    %c374_106 = arith.constant 374 : index
    %113 = vector.load %arg8[%c4_105, %c374_106] : memref<8x544xf32, #tpu.memory_space<vmem>>, vector<4x32xf32>
    %c0_107 = arith.constant 0 : index
    %c817 = arith.constant 817 : index
    %114 = vector.load %arg9[%c0_107, %c817] : memref<4x1190xf32, #tpu.memory_space<vmem>>, vector<4x32xf32>
    tpu.vector_store %arg9[%c0_107, %c817], %113 {strides = array<i32>} : memref<4x1190xf32, #tpu.memory_space<vmem>>, vector<4x32xf32>,
    %c0_108 = arith.constant 0 : index
    %c408 = arith.constant 408 : index
    %115 = vector.load %arg8[%c0_108, %c408] : memref<8x544xf32, #tpu.memory_space<vmem>>, vector<4x32xf32>
    %c0_109 = arith.constant 0 : index
    %c851 = arith.constant 851 : index
    %116 = vector.load %arg9[%c0_109, %c851] : memref<4x1190xf32, #tpu.memory_space<vmem>>, vector<4x32xf32>
    tpu.vector_store %arg9[%c0_109, %c851], %115 {strides = array<i32>} : memref<4x1190xf32, #tpu.memory_space<vmem>>, vector<4x32xf32>,
    %c4_110 = arith.constant 4 : index
    %c408_111 = arith.constant 408 : index
    %117 = vector.load %arg8[%c4_110, %c408_111] : memref<8x544xf32, #tpu.memory_space<vmem>>, vector<4x32xf32>
    %c0_112 = arith.constant 0 : index
    %c885 = arith.constant 885 : index
    %118 = vector.load %arg9[%c0_112, %c885] : memref<4x1190xf32, #tpu.memory_space<vmem>>, vector<4x32xf32>
    tpu.vector_store %arg9[%c0_112, %c885], %117 {strides = array<i32>} : memref<4x1190xf32, #tpu.memory_space<vmem>>, vector<4x32xf32>,
    %c0_113 = arith.constant 0 : index
    %c442 = arith.constant 442 : index
    %119 = vector.load %arg8[%c0_113, %c442] : memref<8x544xf32, #tpu.memory_space<vmem>>, vector<4x32xf32>
    %c0_114 = arith.constant 0 : index
    %c919 = arith.constant 919 : index
    %120 = vector.load %arg9[%c0_114, %c919] : memref<4x1190xf32, #tpu.memory_space<vmem>>, vector<4x32xf32>
    tpu.vector_store %arg9[%c0_114, %c919], %119 {strides = array<i32>} : memref<4x1190xf32, #tpu.memory_space<vmem>>, vector<4x32xf32>,
    %c4_115 = arith.constant 4 : index
    %c442_116 = arith.constant 442 : index
    %121 = vector.load %arg8[%c4_115, %c442_116] : memref<8x544xf32, #tpu.memory_space<vmem>>, vector<4x32xf32>
    %c0_117 = arith.constant 0 : index
    %c953 = arith.constant 953 : index
    %122 = vector.load %arg9[%c0_117, %c953] : memref<4x1190xf32, #tpu.memory_space<vmem>>, vector<4x32xf32>
    tpu.vector_store %arg9[%c0_117, %c953], %121 {strides = array<i32>} : memref<4x1190xf32, #tpu.memory_space<vmem>>, vector<4x32xf32>,
    %c0_118 = arith.constant 0 : index
    %c476 = arith.constant 476 : index
    %123 = vector.load %arg8[%c0_118, %c476] : memref<8x544xf32, #tpu.memory_space<vmem>>, vector<4x32xf32>
    %c0_119 = arith.constant 0 : index
    %c987 = arith.constant 987 : index
    %124 = vector.load %arg9[%c0_119, %c987] : memref<4x1190xf32, #tpu.memory_space<vmem>>, vector<4x32xf32>
    tpu.vector_store %arg9[%c0_119, %c987], %123 {strides = array<i32>} : memref<4x1190xf32, #tpu.memory_space<vmem>>, vector<4x32xf32>,
    %c4_120 = arith.constant 4 : index
    %c476_121 = arith.constant 476 : index
    %125 = vector.load %arg8[%c4_120, %c476_121] : memref<8x544xf32, #tpu.memory_space<vmem>>, vector<4x32xf32>
    %c0_122 = arith.constant 0 : index
    %c1021 = arith.constant 1021 : index
    %126 = vector.load %arg9[%c0_122, %c1021] : memref<4x1190xf32, #tpu.memory_space<vmem>>, vector<4x32xf32>
    tpu.vector_store %arg9[%c0_122, %c1021], %125 {strides = array<i32>} : memref<4x1190xf32, #tpu.memory_space<vmem>>, vector<4x32xf32>,
    %c0_123 = arith.constant 0 : index
    %c510 = arith.constant 510 : index
    %127 = vector.load %arg8[%c0_123, %c510] : memref<8x544xf32, #tpu.memory_space<vmem>>, vector<4x32xf32>
    %c0_124 = arith.constant 0 : index
    %c1055 = arith.constant 1055 : index
    %128 = vector.load %arg9[%c0_124, %c1055] : memref<4x1190xf32, #tpu.memory_space<vmem>>, vector<4x32xf32>
    tpu.vector_store %arg9[%c0_124, %c1055], %127 {strides = array<i32>} : memref<4x1190xf32, #tpu.memory_space<vmem>>, vector<4x32xf32>,
    %c4_125 = arith.constant 4 : index
    %c510_126 = arith.constant 510 : index
    %129 = vector.load %arg8[%c4_125, %c510_126] : memref<8x544xf32, #tpu.memory_space<vmem>>, vector<4x32xf32>
    %c0_127 = arith.constant 0 : index
    %c1089 = arith.constant 1089 : index
    %130 = vector.load %arg9[%c0_127, %c1089] : memref<4x1190xf32, #tpu.memory_space<vmem>>, vector<4x32xf32>
    tpu.vector_store %arg9[%c0_127, %c1089], %129 {strides = array<i32>} : memref<4x1190xf32, #tpu.memory_space<vmem>>, vector<4x32xf32>,
    %c0_128 = arith.constant 0 : index
    %c0_129 = arith.constant 0 : index
    %131 = vector.load %arg9[%c0_128, %c0_129] : memref<4x1190xf32, #tpu.memory_space<vmem>>, vector<4x1088xf32>
    %c0_130 = arith.constant 0 : index
    %c0_131 = arith.constant 0 : index
    %132 = vector.load %arg10[%c0_130, %c0_131] : memref<36x1088xf32, #tpu.memory_space<vmem>>, vector<4x1088xf32>
    tpu.vector_store %arg10[%c0_130, %c0_131], %131 {strides = array<i32>} : memref<36x1088xf32, #tpu.memory_space<vmem>>, vector<4x1088xf32>,
    %c0_132 = arith.constant 0 : index
    %c1_133 = arith.constant 1 : index
    %133 = vector.load %arg9[%c0_132, %c1_133] : memref<4x1190xf32, #tpu.memory_space<vmem>>, vector<4x1088xf32>
    %c4_134 = arith.constant 4 : index
    %c0_135 = arith.constant 0 : index
    %134 = vector.load %arg10[%c4_134, %c0_135] : memref<36x1088xf32, #tpu.memory_space<vmem>>, vector<4x1088xf32>
    tpu.vector_store %arg10[%c4_134, %c0_135], %133 {strides = array<i32>} : memref<36x1088xf32, #tpu.memory_space<vmem>>, vector<4x1088xf32>,
    %c0_136 = arith.constant 0 : index
    %c2_137 = arith.constant 2 : index
    %135 = vector.load %arg9[%c0_136, %c2_137] : memref<4x1190xf32, #tpu.memory_space<vmem>>, vector<4x1088xf32>
    %c8_138 = arith.constant 8 : index
    %c0_139 = arith.constant 0 : index
    %136 = vector.load %arg10[%c8_138, %c0_139] : memref<36x1088xf32, #tpu.memory_space<vmem>>, vector<4x1088xf32>
    tpu.vector_store %arg10[%c8_138, %c0_139], %135 {strides = array<i32>} : memref<36x1088xf32, #tpu.memory_space<vmem>>, vector<4x1088xf32>,
    %c0_140 = arith.constant 0 : index
    %c34_141 = arith.constant 34 : index
    %137 = vector.load %arg9[%c0_140, %c34_141] : memref<4x1190xf32, #tpu.memory_space<vmem>>, vector<4x1088xf32>
    %c12_142 = arith.constant 12 : index
    %c0_143 = arith.constant 0 : index
    %138 = vector.load %arg10[%c12_142, %c0_143] : memref<36x1088xf32, #tpu.memory_space<vmem>>, vector<4x1088xf32>
    tpu.vector_store %arg10[%c12_142, %c0_143], %137 {strides = array<i32>} : memref<36x1088xf32, #tpu.memory_space<vmem>>, vector<4x1088xf32>,
    %c0_144 = arith.constant 0 : index
    %c35_145 = arith.constant 35 : index
    %139 = vector.load %arg9[%c0_144, %c35_145] : memref<4x1190xf32, #tpu.memory_space<vmem>>, vector<4x1088xf32>
    %c16_146 = arith.constant 16 : index
    %c0_147 = arith.constant 0 : index
    %140 = vector.load %arg10[%c16_146, %c0_147] : memref<36x1088xf32, #tpu.memory_space<vmem>>, vector<4x1088xf32>
    tpu.vector_store %arg10[%c16_146, %c0_147], %139 {strides = array<i32>} : memref<36x1088xf32, #tpu.memory_space<vmem>>, vector<4x1088xf32>,
    %c0_148 = arith.constant 0 : index
    %c36_149 = arith.constant 36 : index
    %141 = vector.load %arg9[%c0_148, %c36_149] : memref<4x1190xf32, #tpu.memory_space<vmem>>, vector<4x1088xf32>
    %c20_150 = arith.constant 20 : index
    %c0_151 = arith.constant 0 : index
    %142 = vector.load %arg10[%c20_150, %c0_151] : memref<36x1088xf32, #tpu.memory_space<vmem>>, vector<4x1088xf32>
    tpu.vector_store %arg10[%c20_150, %c0_151], %141 {strides = array<i32>} : memref<36x1088xf32, #tpu.memory_space<vmem>>, vector<4x1088xf32>,
    %c0_152 = arith.constant 0 : index
    %c68_153 = arith.constant 68 : index
    %143 = vector.load %arg9[%c0_152, %c68_153] : memref<4x1190xf32, #tpu.memory_space<vmem>>, vector<4x1088xf32>
    %c24 = arith.constant 24 : index
    %c0_154 = arith.constant 0 : index
    %144 = vector.load %arg10[%c24, %c0_154] : memref<36x1088xf32, #tpu.memory_space<vmem>>, vector<4x1088xf32>
    tpu.vector_store %arg10[%c24, %c0_154], %143 {strides = array<i32>} : memref<36x1088xf32, #tpu.memory_space<vmem>>, vector<4x1088xf32>,
    %c0_155 = arith.constant 0 : index
    %c69_156 = arith.constant 69 : index
    %145 = vector.load %arg9[%c0_155, %c69_156] : memref<4x1190xf32, #tpu.memory_space<vmem>>, vector<4x1088xf32>
    %c28 = arith.constant 28 : index
    %c0_157 = arith.constant 0 : index
    %146 = vector.load %arg10[%c28, %c0_157] : memref<36x1088xf32, #tpu.memory_space<vmem>>, vector<4x1088xf32>
    tpu.vector_store %arg10[%c28, %c0_157], %145 {strides = array<i32>} : memref<36x1088xf32, #tpu.memory_space<vmem>>, vector<4x1088xf32>,
    %c0_158 = arith.constant 0 : index
    %c70 = arith.constant 70 : index
    %147 = vector.load %arg9[%c0_158, %c70] : memref<4x1190xf32, #tpu.memory_space<vmem>>, vector<4x1088xf32>
    %c32 = arith.constant 32 : index
    %c0_159 = arith.constant 0 : index
    %148 = vector.load %arg10[%c32, %c0_159] : memref<36x1088xf32, #tpu.memory_space<vmem>>, vector<4x1088xf32>
    tpu.vector_store %arg10[%c32, %c0_159], %147 {strides = array<i32>} : memref<36x1088xf32, #tpu.memory_space<vmem>>, vector<4x1088xf32>,
    %c0_160 = arith.constant 0 : index
    %c0_161 = arith.constant 0 : index
    %149 = vector.load %arg4[%c0_160, %c0_161] : memref<8x36xf32, #tpu.memory_space<vmem>>, vector<8x36xf32>
    %c0_162 = arith.constant 0 : index
    %c0_163 = arith.constant 0 : index
    %150 = vector.load %arg10[%c0_162, %c0_163] : memref<36x1088xf32, #tpu.memory_space<vmem>>, vector<36x1088xf32>
    %cst_164 = arith.constant dense<0.000000e+00> : vector<8x1088xf32>
    %151 = tpu.matmul %149, %150, %cst_164 {dimension_numbers = #tpu.dot_dimension_numbers<[1], [0], [0], [1], [0, 0, 1, 1], [], []>} : vector<8x36xf32>, vector<36x1088xf32>, vector<8x1088xf32> -> vector<8x1088xf32>
    %c0_165 = arith.constant 0 : index
    %c0_166 = arith.constant 0 : index
    %152 = vector.load %arg5[%c0_165, %c0_166] : memref<8x1xf32, #tpu.memory_space<vmem>>, vector<8x1xf32>
    %153 = vector.broadcast %152 : vector<8x1xf32> to vector<8x1088xf32>
    %154 = arith.addf %151, %153 : vector<8x1088xf32>
    %cst_167 = arith.constant 0.707106769 : f32
    %155 = vector.broadcast %cst_167 : f32 to vector<8x1088xf32>
    %156 = arith.mulf %154, %155 : vector<8x1088xf32>
    %157 = math.absf %156 : vector<8x1088xf32>
    %cst_168 = arith.constant 0.327591091 : f32
    %158 = vector.broadcast %cst_168 : f32 to vector<8x1088xf32>
    %159 = arith.mulf %158, %157 : vector<8x1088xf32>
    %cst_169 = arith.constant 1.000000e+00 : f32
    %160 = vector.broadcast %cst_169 : f32 to vector<8x1088xf32>
    %161 = arith.addf %160, %159 : vector<8x1088xf32>
    %cst_170 = arith.constant 1.000000e+00 : f32
    %162 = vector.broadcast %cst_170 : f32 to vector<8x1088xf32>
    %163 = arith.divf %162, %161 : vector<8x1088xf32>
    %cst_171 = arith.constant 1.06140542 : f32
    %164 = vector.broadcast %cst_171 : f32 to vector<8x1088xf32>
    %165 = arith.mulf %163, %164 : vector<8x1088xf32>
    %cst_172 = arith.constant -1.45315206 : f32
    %166 = vector.broadcast %cst_172 : f32 to vector<8x1088xf32>
    %167 = arith.addf %166, %165 : vector<8x1088xf32>
    %168 = arith.mulf %163, %167 : vector<8x1088xf32>
    %cst_173 = arith.constant 1.42141378 : f32
    %169 = vector.broadcast %cst_173 : f32 to vector<8x1088xf32>
    %170 = arith.addf %169, %168 : vector<8x1088xf32>
    %171 = arith.mulf %163, %170 : vector<8x1088xf32>
    %cst_174 = arith.constant -0.284496725 : f32
    %172 = vector.broadcast %cst_174 : f32 to vector<8x1088xf32>
    %173 = arith.addf %172, %171 : vector<8x1088xf32>
    %174 = arith.mulf %163, %173 : vector<8x1088xf32>
    %cst_175 = arith.constant 0.254829586 : f32
    %175 = vector.broadcast %cst_175 : f32 to vector<8x1088xf32>
    %176 = arith.addf %175, %174 : vector<8x1088xf32>
    %177 = arith.mulf %163, %176 : vector<8x1088xf32>
    %178 = arith.mulf %157, %157 : vector<8x1088xf32>
    %cst_176 = arith.constant 0.000000e+00 : f32
    %179 = vector.broadcast %cst_176 : f32 to vector<8x1088xf32>
    %180 = arith.subf %179, %178 : vector<8x1088xf32>
    %181 = math.exp %180 : vector<8x1088xf32>
    %182 = arith.mulf %177, %181 : vector<8x1088xf32>
    %cst_177 = arith.constant 1.000000e+00 : f32
    %183 = vector.broadcast %cst_177 : f32 to vector<8x1088xf32>
    %184 = arith.subf %183, %182 : vector<8x1088xf32>
    %cst_178 = arith.constant 0.000000e+00 : f32
    %185 = vector.broadcast %cst_178 : f32 to vector<8x1088xf32>
    %186 = arith.cmpf oge, %156, %185 : vector<8x1088xf32>
    %cst_179 = arith.constant 0.000000e+00 : f32
    %187 = vector.broadcast %cst_179 : f32 to vector<8x1088xf32>
    %188 = arith.subf %187, %184 : vector<8x1088xf32>
    %189 = arith.select %186, %184, %188 : vector<8x1088xi1>, vector<8x1088xf32>
    %cst_180 = arith.constant 5.000000e-01 : f32
    %190 = vector.broadcast %cst_180 : f32 to vector<8x1088xf32>
    %191 = arith.mulf %190, %154 : vector<8x1088xf32>
    %cst_181 = arith.constant 1.000000e+00 : f32
    %192 = vector.broadcast %cst_181 : f32 to vector<8x1088xf32>
    %193 = arith.addf %192, %189 : vector<8x1088xf32>
    %194 = arith.mulf %191, %193 : vector<8x1088xf32>
    %c0_182 = arith.constant 0 : index
    %c0_183 = arith.constant 0 : index
    %c0_184 = arith.constant 0 : index
    %195 = vector.load %arg6[%c0_182, %c0_183, %c0_184] : memref<1x8x1088xf32, #tpu.memory_space<vmem>>, vector<1x8x1088xf32>
    %196 = vector.shape_cast %195 : vector<1x8x1088xf32> to vector<8x1088xf32>
    %197 = vector.shape_cast %194 : vector<8x1088xf32> to vector<1x8x1088xf32>
    tpu.vector_store %arg6[%c0_182, %c0_183, %c0_184], %197 {strides = array<i32>} : memref<1x8x1088xf32, #tpu.memory_space<vmem>>, vector<1x8x1088xf32>,
    return
  }
  func.func @transform_0(%arg0: i32) -> (i32, i32, i32) {
    %c0_i32 = arith.constant 0 : i32
    %c0_i32_0 = arith.constant 0 : i32
    %c0_i32_1 = arith.constant 0 : i32
    return %arg0, %c0_i32, %c0_i32_0 : i32, i32, i32
  }
  func.func @transform_1(%arg0: i32) -> (i32, i32) {
    %c0_i32 = arith.constant 0 : i32
    %c0_i32_0 = arith.constant 0 : i32
    %c0_i32_1 = arith.constant 0 : i32
    return %c0_i32, %c0_i32_0 : i32, i32
  }
  func.func @transform_2(%arg0: i32) -> (i32, i32) {
    %c0_i32 = arith.constant 0 : i32
    %c0_i32_0 = arith.constant 0 : i32
    %c0_i32_1 = arith.constant 0 : i32
    return %c0_i32, %c0_i32_0 : i32, i32
  }
  func.func @transform_3(%arg0: i32) -> (i32, i32) {
    %c0_i32 = arith.constant 0 : i32
    %c0_i32_0 = arith.constant 0 : i32
    %c0_i32_1 = arith.constant 0 : i32
    return %c0_i32, %c0_i32_0 : i32, i32
  }
  func.func @transform_4(%arg0: i32) -> (i32, i32) {
    %c0_i32 = arith.constant 0 : i32
    %c0_i32_0 = arith.constant 0 : i32
    %c0_i32_1 = arith.constant 0 : i32
    return %c0_i32, %c0_i32_0 : i32, i32
  }
  func.func @transform_5(%arg0: i32) -> (i32, i32, i32) {
    %c0_i32 = arith.constant 0 : i32
    %c0_i32_0 = arith.constant 0 : i32
    %c0_i32_1 = arith.constant 0 : i32
    return %arg0, %c0_i32, %c0_i32_0 : i32, i32, i32
  }
}

</mosaic_0001>

<llo_original>
// kernel: upconv_forward.1
$region0: #{upconv_forward.1}
  #allocation0 [shape = 'u32[]', space=smem, size = 0x4, offset = 0x4, fixed_abs, tag = 'smem constant byte address 0x4 - core index']
  #allocation1 [shape = 'u32[144,128]{1,0:T(1,128)}', space=vmem, size = 0x12000, scoped, tag = 'internal scratch']
  #allocation2 [shape = 'f32[24,544]{1,0:T(8,128)}', space=vmem, size = 0xf000, scoped, tag = 'scratch operand']
  #allocation3 [shape = 'f32[8,544]{1,0:T(8,128)}', space=vmem, size = 0x5000, scoped, tag = 'scratch operand']
  #allocation4 [shape = 'f32[4,1190]{1,0:T(4,128)}', space=vmem, size = 0x5000, scoped, tag = 'scratch operand']
  #allocation5 [shape = 'f32[36,1088]{1,0:T(8,128)}', space=vmem, size = 0x2d000, scoped, tag = 'scratch operand']
  %s0 = inlined_call_operand.vmem [shape: f32[2,4,612], index: 0, kind: input, shape index: {}]
  %s1 = inlined_call_operand.vmem [shape: f32[8,24], index: 1, kind: input, shape index: {}]
  %s2 = inlined_call_operand.vmem [shape: f32[8,1], index: 2, kind: input, shape index: {}]
  %s3 = inlined_call_operand.vmem [shape: f32[8,36], index: 3, kind: input, shape index: {}]
  %s4 = inlined_call_operand.vmem [shape: f32[8,1], index: 4, kind: input, shape index: {}]
  %s5 = inlined_call_operand.vmem [shape: f32[2,8,1088], index: 5, kind: output, shape index: {}]
  %s6 = sld [smem:[#allocation0]]
  $region53: #{upconv_forward.1} parent=0
    _
  %s8 = ssub.s32 1, %s6
  %s9 = scalar_select 0, %s8, %s6
  loop: start=0, step=1, limit=4
  $region2: #{upconv_forward.1} parent=0 // loop_pre_header
    _
  $region3: #{upconv_forward.1} parent=0 // loop_header
    %s11 = sphi 0, %s15
    %p12 = scmp.ge.s32.totalorder %s11, 4
    %s21 = sphi 0, %s23
    %s24 = sphi 0, %s21
    %s25 = sphi 0, %s24
    %s41 = sphi 0, %s25
    %s45 = sphi 0, %s45
    %s47 = sphi 0, %s45
    %s48 = sphi 0, %s47
    %s62 = sphi 0, %s48
    %s66 = sphi 0, %s66
    %s68 = sphi 0, %s66
    %s69 = sphi 0, %s68
    %s83 = sphi 0, %s69
    %s87 = sphi 0, %s87
    %s89 = sphi 0, %s87
    %s90 = sphi 0, %s89
    %s104 = sphi 0, %s90
    %s108 = sphi 0, %s108
    %s110 = sphi 0, %s108
    %s111 = sphi 0, %s110
    %s125 = sphi 0, %s111
    %s131 = sphi 0, %s133
    %s134 = sphi 0, %s131
    %s135 = sphi 0, %s134
    %s151 = sphi 0, %s135
  $region4: #{upconv_forward.1} parent=0 // loop_header_branch
    %14 = sbr.rel (%p12) target = $region8
  $region5: #{upconv_forward.1} parent=0 // loop_body
    %s16 = ssub.s32 %s11, 1
    %s17 = ssub.s32 %s11, 2
    %s18 = sadd.s32 %s11, 1
    %s19 = ssub.s32 %s11, %s18
    %p20 = scmp.eq.s32.totalorder %s19, 0
    %s22 = sadd.s32 %s21, 1
    %s23 = scalar_select %p20, %s21, %s22
    %p26 = pneg %p20
    %p27 = scmp.eq.s32.totalorder %s11, 1
    %p28 = por %p26, %p27
    %p29 = scmp.ne.s32.totalorder %s21, %s24
    %p30 = scmp.eq.s32.totalorder %s11, 0
    %p31 = por %p29, %p30
    %p32 = scmp.ne.s32.totalorder %s21, %s24
    %p33 = scmp.eq.s32.totalorder %s16, 1
    %p34 = por %p32, %p33
    %p35 = scmp.ne.s32.totalorder %s24, %s25
    %p36 = scmp.eq.s32.totalorder %s16, 0
    %p37 = por %p35, %p36
    %p38 = scmp.ne.s32.totalorder %s24, %s25
    %p39 = scmp.eq.s32.totalorder %s17, 1
    %p40 = por %p38, %p39
    %p42 = scmp.ne.s32.totalorder %s25, %s41
    %p43 = scmp.eq.s32.totalorder %s17, 0
    %p44 = por %p42, %p43
    %s46 = sadd.s32 %s45, 1
    %p49 = scmp.eq.s32.totalorder %s11, 1
    %p50 = scmp.ne.s32.totalorder %s45, %s47
    %p51 = scmp.eq.s32.totalorder %s11, 0
    %p52 = por %p50, %p51
    %p53 = scmp.ne.s32.totalorder %s45, %s47
    %p54 = scmp.eq.s32.totalorder %s16, 1
    %p55 = por %p53, %p54
    %p56 = scmp.ne.s32.totalorder %s47, %s48
    %p57 = scmp.eq.s32.totalorder %s16, 0
    %p58 = por %p56, %p57
    %p59 = scmp.ne.s32.totalorder %s47, %s48
    %p60 = scmp.eq.s32.totalorder %s17, 1
    %p61 = por %p59, %p60
    %p63 = scmp.ne.s32.totalorder %s48, %s62
    %p64 = scmp.eq.s32.totalorder %s17, 0
    %p65 = por %p63, %p64
    %s67 = sadd.s32 %s66, 1
    %p70 = scmp.eq.s32.totalorder %s11, 1
    %p71 = scmp.ne.s32.totalorder %s66, %s68
    %p72 = scmp.eq.s32.totalorder %s11, 0
    %p73 = por %p71, %p72
    %p74 = scmp.ne.s32.totalorder %s66, %s68
    %p75 = scmp.eq.s32.totalorder %s16, 1
    %p76 = por %p74, %p75
    %p77 = scmp.ne.s32.totalorder %s68, %s69
    %p78 = scmp.eq.s32.totalorder %s16, 0
    %p79 = por %p77, %p78
    %p80 = scmp.ne.s32.totalorder %s68, %s69
    %p81 = scmp.eq.s32.totalorder %s17, 1
    %p82 = por %p80, %p81
    %p84 = scmp.ne.s32.totalorder %s69, %s83
    %p85 = scmp.eq.s32.totalorder %s17, 0
    %p86 = por %p84, %p85
    %s88 = sadd.s32 %s87, 1
    %p91 = scmp.eq.s32.totalorder %s11, 1
    %p92 = scmp.ne.s32.totalorder %s87, %s89
    %p93 = scmp.eq.s32.totalorder %s11, 0
    %p94 = por %p92, %p93
    %p95 = scmp.ne.s32.totalorder %s87, %s89
    %p96 = scmp.eq.s32.totalorder %s16, 1
    %p97 = por %p95, %p96
    %p98 = scmp.ne.s32.totalorder %s89, %s90
    %p99 = scmp.eq.s32.totalorder %s16, 0
    %p100 = por %p98, %p99
    %p101 = scmp.ne.s32.totalorder %s89, %s90
    %p102 = scmp.eq.s32.totalorder %s17, 1
    %p103 = por %p101, %p102
    %p105 = scmp.ne.s32.totalorder %s90, %s104
    %p106 = scmp.eq.s32.totalorder %s17, 0
    %p107 = por %p105, %p106
    %s109 = sadd.s32 %s108, 1
    %p112 = scmp.eq.s32.totalorder %s11, 1
    %p113 = scmp.ne.s32.totalorder %s108, %s110
    %p114 = scmp.eq.s32.totalorder %s11, 0
    %p115 = por %p113, %p114
    %p116 = scmp.ne.s32.totalorder %s108, %s110
    %p117 = scmp.eq.s32.totalorder %s16, 1
    %p118 = por %p116, %p117
    %p119 = scmp.ne.s32.totalorder %s110, %s111
    %p120 = scmp.eq.s32.totalorder %s16, 0
    %p121 = por %p119, %p120
    %p122 = scmp.ne.s32.totalorder %s110, %s111
    %p123 = scmp.eq.s32.totalorder %s17, 1
    %p124 = por %p122, %p123
    %p126 = scmp.ne.s32.totalorder %s111, %s125
    %p127 = scmp.eq.s32.totalorder %s17, 0
    %p128 = por %p126, %p127
    %s129 = ssub.s32 %s11, %s18
    %p130 = scmp.eq.s32.totalorder %s129, 0
    %s132 = sadd.s32 %s131, 1
    %s133 = scalar_select %p130, %s131, %s132
    %p136 = pneg %p130
    %p137 = scmp.eq.s32.totalorder %s11, 1
    %p138 = por %p136, %p137
    %p139 = scmp.ne.s32.totalorder %s131, %s134
    %p140 = scmp.eq.s32.totalorder %s11, 0
    %p141 = por %p139, %p140
    %p142 = scmp.ne.s32.totalorder %s131, %s134
    %p143 = scmp.eq.s32.totalorder %s16, 1
    %p144 = por %p142, %p143
    %p145 = scmp.ne.s32.totalorder %s134, %s135
    %p146 = scmp.eq.s32.totalorder %s16, 0
    %p147 = por %p145, %p146
    %p148 = scmp.ne.s32.totalorder %s134, %s135
    %p149 = scmp.eq.s32.totalorder %s17, 1
    %p150 = por %p148, %p149
    %p152 = scmp.ne.s32.totalorder %s135, %s151
    %p153 = scmp.eq.s32.totalorder %s17, 0
    %p154 = por %p152, %p153
    %p155 = scmp.le.s32.totalorder 1, %s11
    %p156 = scmp.lt.s32.totalorder %s11, 3
    %p157 = pnand %p155, %p156
    %p158 = pneg %p157
    // Predicated region
    $region9: #{upconv_forward.1} parent=5 // pred_check
      _
    $region10: #{upconv_forward.1} parent=5 // pred_check_branch
      %160 = sbr.rel (%p157) target = $region12
    $region11: #{upconv_forward.1} parent=5 // pred_region
      %s161 = ssub.s32 %s11, 1
      // Predicated region
      $region13: #{upconv_forward.1} parent=11 // pred_check
        %p162 = pneg %p58
      $region14: #{upconv_forward.1} parent=11 // pred_check_branch
        %164 = sbr.rel (%p162) target = $region16
      $region15: #{upconv_forward.1} parent=11 // pred_region
        _
      $region16: #{upconv_forward.1} parent=11 // pred_fallthru
        _
      // Predicated region
      $region17: #{upconv_forward.1} parent=11 // pred_check
        %p165 = pneg %p79
      $region18: #{upconv_forward.1} parent=11 // pred_check_branch
        %167 = sbr.rel (%p165) target = $region20
      $region19: #{upconv_forward.1} parent=11 // pred_region
        _
      $region20: #{upconv_forward.1} parent=11 // pred_fallthru
        _
      // Predicated region
      $region21: #{upconv_forward.1} parent=11 // pred_check
        %p168 = pneg %p100
      $region22: #{upconv_forward.1} parent=11 // pred_check_branch
        %170 = sbr.rel (%p168) target = $region24
      $region23: #{upconv_forward.1} parent=11 // pred_region
        _
      $region24: #{upconv_forward.1} parent=11 // pred_fallthru
        _
      // Predicated region
      $region25: #{upconv_forward.1} parent=11 // pred_check
        %p171 = pneg %p121
      $region26: #{upconv_forward.1} parent=11 // pred_check_branch
        %173 = sbr.rel (%p171) target = $region28
      $region27: #{upconv_forward.1} parent=11 // pred_region
        _
      $region28: #{upconv_forward.1} parent=11 // pred_fallthru
        _
    $region12: #{upconv_forward.1} parent=5 // pred_fallthru
      _
    %p174 = scmp.lt.s32.totalorder %s11, 2
    // Predicated region
    $region29: #{upconv_forward.1} parent=5 // pred_check
      %p175 = pneg %p174
    $region30: #{upconv_forward.1} parent=5 // pred_check_branch
      %177 = sbr.rel (%p175) target = $region32
    $region31: #{upconv_forward.1} parent=5 // pred_region
      // Predicated region
      $region33: #{upconv_forward.1} parent=31 // pred_check
        %p178 = pneg %p31
      $region34: #{upconv_forward.1} parent=31 // pred_check_branch
        %180 = sbr.rel (%p178) target = $region36
      $region35: #{upconv_forward.1} parent=31 // pred_region
        %p181 = scmp.lt.s32.totalorder %s11, 1
        %s182 = scalar_select %p181, %s11, 1
        %s183 = smul.addr %s182, 5
        %s184 = smul.addr %s183, 4
        %s185 = scalar_lea.vmem %s0, %s184
      $region36: #{upconv_forward.1} parent=31 // pred_fallthru
        _
    $region32: #{upconv_forward.1} parent=5 // pred_fallthru
      _
    %p186 = scmp.le.s32.totalorder 1, %s11
    %p187 = scmp.lt.s32.totalorder %s11, 3
    %p188 = pnand %p186, %p187
    %p189 = pneg %p188
    // Predicated region
    $region37: #{upconv_forward.1} parent=5 // pred_check
      _
    $region38: #{upconv_forward.1} parent=5 // pred_check_branch
      %191 = sbr.rel (%p188) target = $region40
    $region39: #{upconv_forward.1} parent=5 // pred_region
      %s192 = ssub.s32 %s11, 1
      %p193 = scmp.lt.s32.totalorder %s16, 1
      %s194 = scalar_select %p193, %s16, 1
      %s195 = smul.addr %s194, 5
      %s196 = smul.addr %s195, 4
      %s197 = scalar_lea.vmem %s0, %s196
      %p198 = pneg %p37
      %p199 = pneg %p34
      %p200 = pneg %p58
      %p201 = pneg %p55
      %p202 = pneg %p79
      %p203 = pneg %p76
      %p204 = pneg %p100
      %p205 = pneg %p97
      %p206 = pneg %p121
      %p207 = pneg %p118
      %p208 = pneg %p147
      %p209 = pneg %p144
      %p210 = scmp.lt.s32.totalorder %s16, 1
      %s211 = scalar_select %p210, %s16, 1
      %s212 = smul.addr %s211, 9
      %s213 = smul.addr %s212, 8
      %s214 = scalar_lea.vmem %s5, %s213
      %p215 = scmp.lt.s32.totalorder %s16, 1
      %s216 = scalar_select %p215, %s16, 1
      %s217 = smul.addr %s216, 5
      %s218 = smul.addr %s217, 4
      %s219 = scalar_lea.vmem %s0, %s218
      %p220 = scmp.lt.s32.totalorder %s16, 1
      %s221 = scalar_select %p220, %s16, 1
      %s222 = smul.addr %s221, 9
      %s223 = smul.addr %s222, 8
      %s224 = scalar_lea.vmem %s5, %s223
      %v225 = vld [vmem:[%s219] sm:$0xff]
      %v226 = vld [vmem:[%s219 + $0x8] sm:$0xff]
      %v227 = vld [vmem:[%s219 + $0x10] sm:$0xf]
      %v230 = vcombine.high %v225, %v225
      %v231 = vcombine.high %v226, %v226
      %234 = vst [vmem:[#allocation2] sm:$0xf] %v225
      %235 = vst [vmem:[#allocation2 + $0x8] sm:$0xf] %v230
      %236 = vst [vmem:[#allocation2 + $0x10] sm:$0xf] %v226
      %237 = vst [vmem:[#allocation2 + $0x18] sm:$0xf] %v231
      %vm238 = vcmask 257024
      %239 = vst.msk [vmem:[#allocation2 + $0x20] sm:$0xf] %vm238, %v227
      %v240 = vld [vmem:[%s219] sm:$0xff]
      %v241 = vld [vmem:[%s219 + $0x8] sm:$0xff]
      %v242 = vld [vmem:[%s219 + $0x10] sm:$0xf]
      %v246 = vcombine.low %v240, %v240
      %v247 = vcombine.low %v241, %v241
      %v248 = vcombine.low %v242, %v242
      %249 = vrot.lane.b32.xlu0 %v246, 127
      %v250 = vpop.permute.xlu0 %249
      %251 = vrot.lane.b32.xlu0 %v240, 127
      %v252 = vpop.permute.xlu0 %251
      %253 = vrot.lane.b32.xlu0 %v247, 127
      %v254 = vpop.permute.xlu0 %253
      %255 = vrot.lane.b32.xlu0 %v241, 127
      %v256 = vpop.permute.xlu0 %255
      %257 = vrot.lane.b32.xlu0 %v248, 127
      %v258 = vpop.permute.xlu0 %257
      %vm259 = vcmask 1039360
      %v260 = vsel %vm259, %v250, %v252
      %v261 = vsel %vm259, %v252, %v254
      %v262 = vsel %vm259, %v254, %v256
      %v263 = vsel %vm259, %v256, %v258
      %269 = vst [vmem:[#allocation2] sm:$0xf0] %v260
      %270 = vst [vmem:[#allocation2 + $0x8] sm:$0xf0] %v261
      %271 = vst [vmem:[#allocation2 + $0x10] sm:$0xf0] %v262
      %272 = vst [vmem:[#allocation2 + $0x18] sm:$0xf0] %v263
      %vm273 = vcmask 261124
      %274 = vst.msk [vmem:[#allocation2 + $0x20] sm:$0xf0] %vm273, %v258
      %v275 = vld [vmem:[%s219] sm:$0xff]
      %v276 = vld [vmem:[%s219 + $0x8] sm:$0xff]
      %v277 = vld [vmem:[%s219 + $0x10] sm:$0xf]
      %v281 = vcombine.high %v275, %v275
      %v282 = vcombine.high %v276, %v276
      %283 = vrot.lane.b32.xlu0 %v275, 126
      %v284 = vpop.permute.xlu0 %283
      %285 = vrot.lane.b32.xlu0 %v281, 126
      %v286 = vpop.permute.xlu0 %285
      %287 = vrot.lane.b32.xlu0 %v276, 126
      %v288 = vpop.permute.xlu0 %287
      %289 = vrot.lane.b32.xlu0 %v282, 126
      %v290 = vpop.permute.xlu0 %289
      %291 = vrot.lane.b32.xlu0 %v277, 126
      %v292 = vpop.permute.xlu0 %291
      %vm293 = vcmask 1031168
      %v294 = vsel %vm293, %v284, %v286
      %v295 = vsel %vm293, %v286, %v288
      %v296 = vsel %vm293, %v288, %v290
      %v297 = vsel %vm293, %v290, %v292
      %303 = vst [vmem:[#allocation2 + $0x28] sm:$0xf] %v294
      %304 = vst [vmem:[#allocation2 + $0x30] sm:$0xf] %v295
      %305 = vst [vmem:[#allocation2 + $0x38] sm:$0xf] %v296
      %306 = vst [vmem:[#allocation2 + $0x40] sm:$0xf] %v297
      %307 = vst.msk [vmem:[#allocation2 + $0x48] sm:$0xf] %vm238, %v292
      %v308 = vld [vmem:[%s219] sm:$0xff]
      %v309 = vld [vmem:[%s219 + $0x8] sm:$0xff]
      %v310 = vld [vmem:[%s219 + $0x10] sm:$0xf]
      %v314 = vcombine.low %v308, %v308
      %v315 = vcombine.low %v309, %v309
      %v316 = vcombine.low %v310, %v310
      %317 = vrot.lane.b32.xlu0 %v314, 94
      %v318 = vpop.permute.xlu0 %317
      %319 = vrot.lane.b32.xlu0 %v308, 94
      %v320 = vpop.permute.xlu0 %319
      %321 = vrot.lane.b32.xlu0 %v315, 94
      %v322 = vpop.permute.xlu0 %321
      %323 = vrot.lane.b32.xlu0 %v309, 94
      %v324 = vpop.permute.xlu0 %323
      %325 = vrot.lane.b32.xlu0 %v316, 94
      %v326 = vpop.permute.xlu0 %325
      %vm327 = vcmask 769024
      %v328 = vsel %vm327, %v318, %v320
      %v329 = vsel %vm327, %v320, %v322
      %v330 = vsel %vm327, %v322, %v324
      %v331 = vsel %vm327, %v324, %v326
      %337 = vst [vmem:[#allocation2 + $0x28] sm:$0xf0] %v328
      %338 = vst [vmem:[#allocation2 + $0x30] sm:$0xf0] %v329
      %339 = vst [vmem:[#allocation2 + $0x38] sm:$0xf0] %v330
      %340 = vst [vmem:[#allocation2 + $0x40] sm:$0xf0] %v331
      %341 = vst.msk [vmem:[#allocation2 + $0x48] sm:$0xf0] %vm273, %v326
      %v342 = vld [vmem:[%s219] sm:$0xff]
      %v343 = vld [vmem:[%s219 + $0x8] sm:$0xff]
      %v344 = vld [vmem:[%s219 + $0x10] sm:$0xf]
      %v348 = vcombine.high %v342, %v342
      %v349 = vcombine.high %v343, %v343
      %350 = vrot.lane.b32.xlu0 %v342, 93
      %v351 = vpop.permute.xlu0 %350
      %352 = vrot.lane.b32.xlu0 %v348, 93
      %v353 = vpop.permute.xlu0 %352
      %354 = vrot.lane.b32.xlu0 %v343, 93
      %v355 = vpop.permute.xlu0 %354
      %356 = vrot.lane.b32.xlu0 %v349, 93
      %v357 = vpop.permute.xlu0 %356
      %358 = vrot.lane.b32.xlu0 %v344, 93
      %v359 = vpop.permute.xlu0 %358
      %vm360 = vcmask 760832
      %v361 = vsel %vm360, %v351, %v353
      %v362 = vsel %vm360, %v353, %v355
      %v363 = vsel %vm360, %v355, %v357
      %v364 = vsel %vm360, %v357, %v359
      %370 = vst [vmem:[#allocation2 + $0x50] sm:$0xf] %v361
      %371 = vst [vmem:[#allocation2 + $0x58] sm:$0xf] %v362
      %372 = vst [vmem:[#allocation2 + $0x60] sm:$0xf] %v363
      %373 = vst [vmem:[#allocation2 + $0x68] sm:$0xf] %v364
      %374 = vst.msk [vmem:[#allocation2 + $0x70] sm:$0xf] %vm238, %v359
      %v375 = vld [vmem:[%s219] sm:$0xff]
      %v376 = vld [vmem:[%s219 + $0x8] sm:$0xff]
      %v377 = vld [vmem:[%s219 + $0x10] sm:$0xf]
      %v381 = vcombine.low %v375, %v375
      %v382 = vcombine.low %v376, %v376
      %v383 = vcombine.low %v377, %v377
      %384 = vrot.lane.b32.xlu0 %v381, 92
      %v385 = vpop.permute.xlu0 %384
      %386 = vrot.lane.b32.xlu0 %v375, 92
      %v387 = vpop.permute.xlu0 %386
      %388 = vrot.lane.b32.xlu0 %v382, 92
      %v389 = vpop.permute.xlu0 %388
      %390 = vrot.lane.b32.xlu0 %v376, 92
      %v391 = vpop.permute.xlu0 %390
      %392 = vrot.lane.b32.xlu0 %v383, 92
      %v393 = vpop.permute.xlu0 %392
      %vm394 = vcmask 752640
      %v395 = vsel %vm394, %v385, %v387
      %v396 = vsel %vm394, %v387, %v389
      %v397 = vsel %vm394, %v389, %v391
      %v398 = vsel %vm394, %v391, %v393
      %404 = vst [vmem:[#allocation2 + $0x50] sm:$0xf0] %v395
      %405 = vst [vmem:[#allocation2 + $0x58] sm:$0xf0] %v396
      %406 = vst [vmem:[#allocation2 + $0x60] sm:$0xf0] %v397
      %407 = vst [vmem:[#allocation2 + $0x68] sm:$0xf0] %v398
      %408 = vst.msk [vmem:[#allocation2 + $0x70] sm:$0xf0] %vm273, %v393
      %v409 = vld [vmem:[%s1] sm:$0xff]
      %v410 = vld [vmem:[#allocation2] sm:$0xff]
      %v411 = vld [vmem:[#allocation2 + $0x8] sm:$0xff]
      %v412 = vld [vmem:[#allocation2 + $0x10] sm:$0xff]
      %v413 = vld [vmem:[#allocation2 + $0x18] sm:$0xff]
      %v414 = vld [vmem:[#allocation2 + $0x20] sm:$0xff]
      %v415 = vld [vmem:[#allocation2 + $0x28] sm:$0xff]
      %v416 = vld [vmem:[#allocation2 + $0x30] sm:$0xff]
      %v417 = vld [vmem:[#allocation2 + $0x38] sm:$0xff]
      %v418 = vld [vmem:[#allocation2 + $0x40] sm:$0xff]
      %v419 = vld [vmem:[#allocation2 + $0x48] sm:$0xff]
      %v420 = vld [vmem:[#allocation2 + $0x50] sm:$0xff]
      %v421 = vld [vmem:[#allocation2 + $0x58] sm:$0xff]
      %v422 = vld [vmem:[#allocation2 + $0x60] sm:$0xff]
      %v423 = vld [vmem:[#allocation2 + $0x68] sm:$0xff]
      %v424 = vld [vmem:[#allocation2 + $0x70] sm:$0xff]
      %v425 = vld [vmem:[%s2] sm:$0xff]
      %427 = vset.pattern.permute.xlu0 0
      %428 = vperm.xlu0 %427, %v425
      %v429 = vpop.permute.xlu0 %428
      %vm431 = vcmask 195584
      %v433 = vsel %vm431, %v409, 0
      %435 = vmatprep.subr.mxu0 %v411
      %436 = vmatpush1.msra.mxu0 %v410
      %437 = vmatprep.subr.mxu0 %v416
      %438 = vmatpush1.msra.mxu0 %v415
      %439 = vmatprep.subr.mxu0 %v421
      %440 = vmatpush1.msra.mxu0 %v420
      %441 = vmatprep.subr.mxu0 0.0
      %442 = vmatpush1.msra.mxu0 0.0
      %443 = vmatprep.subr.mxu0 0.0
      %444 = vmatpush1.msra.mxu0 0.0
      %445 = vmatprep.subr.mxu0 0.0
      %446 = vmatpush1.msra.mxu0 0.0
      %447 = vmatprep.subr.mxu0 0.0
      %448 = vmatpush1.msra.mxu0 0.0
      %449 = vmatprep.subr.mxu0 0.0
      %450 = vmatpush1.msra.mxu0 0.0
      %451 = vmatprep.subr.mxu0 0.0
      %452 = vmatpush1.msra.mxu0 0.0
      %453 = vmatprep.subr.mxu0 0.0
      %454 = vmatpush1.msra.mxu0 0.0
      %455 = vmatprep.subr.mxu0 0.0
      %456 = vmatpush1.msra.mxu0 0.0
      %457 = vmatprep.subr.mxu0 0.0
      %458 = vmatpush1.msra.mxu0 0.0
      %459 = vmatprep.subr.mxu0 0.0
      %460 = vmatpush1.msra.mxu0 0.0
      %461 = vmatprep.subr.mxu0 0.0
      %462 = vmatpush1.msra.mxu0 0.0
      %463 = vmatprep.subr.mxu0 0.0
      %464 = vmatpush1.msra.mxu0 0.0
      %465 = vmatprep.subr.mxu0 0.0
      %466 = vmatpush1.msra.mxu0 0.0
      %467 = vmatprep.subr.mxu0 0.0
      %468 = vmatpush1.msra.mxu0 0.0
      %469 = vmatprep.subr.mxu0 0.0
      %470 = vmatpush1.msra.mxu0 0.0
      %471 = vmatprep.subr.mxu0 0.0
      %472 = vmatpush1.msra.mxu0 0.0
      %473 = vmatprep.subr.mxu0 0.0
      %474 = vmatpush1.msra.mxu0 0.0
      %475 = vmatprep.subr.mxu0 0.0
      %476 = vmatpush1.msra.mxu0 0.0
      %477 = vmatprep.subr.mxu0 0.0
      %478 = vmatpush1.msra.mxu0 0.0
      %479 = vmatprep.subr.mxu0 0.0
      %480 = vmatpush1.msra.mxu0 0.0
      %481 = vmatprep.subr.mxu0 0.0
      %482 = vmatpush1.msra.mxu0 0.0
      %483 = vmatprep.subr.mxu0 0.0
      %484 = vmatpush1.msra.mxu0 0.0
      %485 = vmatprep.subr.mxu0 0.0
      %486 = vmatpush1.msra.mxu0 0.0
      %487 = vmatprep.subr.mxu0 0.0
      %488 = vmatpush1.msra.mxu0 0.0
      %489 = vmatprep.subr.mxu0 0.0
      %490 = vmatpush1.msra.mxu0 0.0
      %491 = vmatprep.subr.mxu0 0.0
      %492 = vmatpush1.msra.mxu0 0.0
      %493 = vmatprep.subr.mxu0 0.0
      %494 = vmatpush1.msra.mxu0 0.0
      %495 = vmatprep.subr.mxu0 0.0
      %496 = vmatpush1.msra.mxu0 0.0
      %497 = vmatprep.subr.mxu0 0.0
      %498 = vmatpush1.msra.mxu0 0.0
      %499 = vmatprep.mubr.f32.mxu0 0.0
      %500 = vmatmul.mubr.f32.gmra.mrb[0].mxu0 %v433
      %v501 = vpop.f32.mrb[0].mxu0
      %v502 = vadd.f32 %v429, %v501
      %v503 = vpop.f32.mrb[0].mxu0
      %v504 = vadd.f32 %v429, %v503
      %505 = vdwg.mxu0
      %506 = vmatprep.subr.mxu0 %v413
      %507 = vmatpush1.msra.mxu0 %v412
      %508 = vmatprep.subr.mxu0 %v418
      %509 = vmatpush1.msra.mxu0 %v417
      %510 = vmatprep.subr.mxu0 %v423
      %511 = vmatpush1.msra.mxu0 %v422
      %512 = vmatprep.subr.mxu0 0.0
      %513 = vmatpush1.msra.mxu0 0.0
      %514 = vmatprep.subr.mxu0 0.0
      %515 = vmatpush1.msra.mxu0 0.0
      %516 = vmatprep.subr.mxu0 0.0
      %517 = vmatpush1.msra.mxu0 0.0
      %518 = vmatprep.subr.mxu0 0.0
      %519 = vmatpush1.msra.mxu0 0.0
      %520 = vmatprep.subr.mxu0 0.0
      %521 = vmatpush1.msra.mxu0 0.0
      %522 = vmatprep.subr.mxu0 0.0
      %523 = vmatpush1.msra.mxu0 0.0
      %524 = vmatprep.subr.mxu0 0.0
      %525 = vmatpush1.msra.mxu0 0.0
      %526 = vmatprep.subr.mxu0 0.0
      %527 = vmatpush1.msra.mxu0 0.0
      %528 = vmatprep.subr.mxu0 0.0
      %529 = vmatpush1.msra.mxu0 0.0
      %530 = vmatprep.subr.mxu0 0.0
      %531 = vmatpush1.msra.mxu0 0.0
      %532 = vmatprep.subr.mxu0 0.0
      %533 = vmatpush1.msra.mxu0 0.0
      %534 = vmatprep.subr.mxu0 0.0
      %535 = vmatpush1.msra.mxu0 0.0
      %536 = vmatprep.subr.mxu0 0.0
      %537 = vmatpush1.msra.mxu0 0.0
      %538 = vmatprep.subr.mxu0 0.0
      %539 = vmatpush1.msra.mxu0 0.0
      %540 = vmatprep.subr.mxu0 0.0
      %541 = vmatpush1.msra.mxu0 0.0
      %542 = vmatprep.subr.mxu0 0.0
      %543 = vmatpush1.msra.mxu0 0.0
      %544 = vmatprep.subr.mxu0 0.0
      %545 = vmatpush1.msra.mxu0 0.0
      %546 = vmatprep.subr.mxu0 0.0
      %547 = vmatpush1.msra.mxu0 0.0
      %548 = vmatprep.subr.mxu0 0.0
      %549 = vmatpush1.msra.mxu0 0.0
      %550 = vmatprep.subr.mxu0 0.0
      %551 = vmatpush1.msra.mxu0 0.0
      %552 = vmatprep.subr.mxu0 0.0
      %553 = vmatpush1.msra.mxu0 0.0
      %554 = vmatprep.subr.mxu0 0.0
      %555 = vmatpush1.msra.mxu0 0.0
      %556 = vmatprep.subr.mxu0 0.0
      %557 = vmatpush1.msra.mxu0 0.0
      %558 = vmatprep.subr.mxu0 0.0
      %559 = vmatpush1.msra.mxu0 0.0
      %560 = vmatprep.subr.mxu0 0.0
      %561 = vmatpush1.msra.mxu0 0.0
      %562 = vmatprep.subr.mxu0 0.0
      %563 = vmatpush1.msra.mxu0 0.0
      %564 = vmatprep.subr.mxu0 0.0
      %565 = vmatpush1.msra.mxu0 0.0
      %566 = vmatprep.subr.mxu0 0.0
      %567 = vmatpush1.msra.mxu0 0.0
      %568 = vmatprep.subr.mxu0 0.0
      %569 = vmatpush1.msra.mxu0 0.0
      %570 = vmatprep.mubr.f32.mxu0 0.0
      %571 = vmatmul.mubr.f32.gmra.mrb[0].mxu0 %v433
      %v572 = vpop.f32.mrb[0].mxu0
      %v573 = vadd.f32 %v429, %v572
      %v574 = vpop.f32.mrb[0].mxu0
      %v575 = vadd.f32 %v429, %v574
      %576 = vdwg.mxu0
      %577 = vmatprep.subr.mxu0 0.0
      %578 = vmatpush1.msra.mxu0 %v414
      %579 = vmatprep.subr.mxu0 0.0
      %580 = vmatpush1.msra.mxu0 %v419
      %581 = vmatprep.subr.mxu0 0.0
      %582 = vmatpush1.msra.mxu0 %v424
      %583 = vmatprep.subr.mxu0 0.0
      %584 = vmatpush1.msra.mxu0 0.0
      %585 = vmatprep.subr.mxu0 0.0
      %586 = vmatpush1.msra.mxu0 0.0
      %587 = vmatprep.subr.mxu0 0.0
      %588 = vmatpush1.msra.mxu0 0.0
      %589 = vmatprep.subr.mxu0 0.0
      %590 = vmatpush1.msra.mxu0 0.0
      %591 = vmatprep.subr.mxu0 0.0
      %592 = vmatpush1.msra.mxu0 0.0
      %593 = vmatprep.subr.mxu0 0.0
      %594 = vmatpush1.msra.mxu0 0.0
      %595 = vmatprep.subr.mxu0 0.0
      %596 = vmatpush1.msra.mxu0 0.0
      %597 = vmatprep.subr.mxu0 0.0
      %598 = vmatpush1.msra.mxu0 0.0
      %599 = vmatprep.subr.mxu0 0.0
      %600 = vmatpush1.msra.mxu0 0.0
      %601 = vmatprep.subr.mxu0 0.0
      %602 = vmatpush1.msra.mxu0 0.0
      %603 = vmatprep.subr.mxu0 0.0
      %604 = vmatpush1.msra.mxu0 0.0
      %605 = vmatprep.subr.mxu0 0.0
      %606 = vmatpush1.msra.mxu0 0.0
      %607 = vmatprep.subr.mxu0 0.0
      %608 = vmatpush1.msra.mxu0 0.0
      %609 = vmatprep.subr.mxu0 0.0
      %610 = vmatpush1.msra.mxu0 0.0
      %611 = vmatprep.subr.mxu0 0.0
      %612 = vmatpush1.msra.mxu0 0.0
      %613 = vmatprep.subr.mxu0 0.0
      %614 = vmatpush1.msra.mxu0 0.0
      %615 = vmatprep.subr.mxu0 0.0
      %616 = vmatpush1.msra.mxu0 0.0
      %617 = vmatprep.subr.mxu0 0.0
      %618 = vmatpush1.msra.mxu0 0.0
      %619 = vmatprep.subr.mxu0 0.0
      %620 = vmatpush1.msra.mxu0 0.0
      %621 = vmatprep.subr.mxu0 0.0
      %622 = vmatpush1.msra.mxu0 0.0
      %623 = vmatprep.subr.mxu0 0.0
      %624 = vmatpush1.msra.mxu0 0.0
      %625 = vmatprep.subr.mxu0 0.0
      %626 = vmatpush1.msra.mxu0 0.0
      %627 = vmatprep.subr.mxu0 0.0
      %628 = vmatpush1.msra.mxu0 0.0
      %629 = vmatprep.subr.mxu0 0.0
      %630 = vmatpush1.msra.mxu0 0.0
      %631 = vmatprep.subr.mxu0 0.0
      %632 = vmatpush1.msra.mxu0 0.0
      %633 = vmatprep.subr.mxu0 0.0
      %634 = vmatpush1.msra.mxu0 0.0
      %635 = vmatprep.subr.mxu0 0.0
      %636 = vmatpush1.msra.mxu0 0.0
      %637 = vmatprep.subr.mxu0 0.0
      %638 = vmatpush1.msra.mxu0 0.0
      %639 = vmatprep.subr.mxu0 0.0
      %640 = vmatpush1.msra.mxu0 0.0
      %641 = vmatprep.mubr.f32.mxu0 0.0
      %642 = vmatmul.mubr.f32.gmra.mrb[0].mxu0 %v433
      %v643 = vpop.f32.mrb[0].mxu0
      %v644 = vadd.f32 %v429, %v643
      %v645 = vpop.f32.mrb[0].mxu0
      %646 = vdwg.mxu0
      %v647 = vmul.f32 %v502, 0.70710677
      %v648 = vmul.f32 %v504, 0.70710677
      %v649 = vmul.f32 %v573, 0.70710677
      %v650 = vmul.f32 %v575, 0.70710677
      %v651 = vmul.f32 %v644, 0.70710677
      %v652 = vand.u32 2147483647, %v647
      %v653 = vand.u32 2147483647, %v648
      %v654 = vand.u32 2147483647, %v649
      %v655 = vand.u32 2147483647, %v650
      %v656 = vand.u32 2147483647, %v651
      %v657 = vmul.f32 %v652, 0.3275911
      %v658 = vmul.f32 %v653, 0.3275911
      %v659 = vmul.f32 %v654, 0.3275911
      %v660 = vmul.f32 %v655, 0.3275911
      %v661 = vmul.f32 %v656, 0.3275911
      %v662 = vadd.f32 %v657, 1.0
      %v663 = vadd.f32 %v658, 1.0
      %v664 = vadd.f32 %v659, 1.0
      %v665 = vadd.f32 %v660, 1.0
      %v666 = vadd.f32 %v661, 1.0
      %v667 = vrcp.pop %v662
      %v668 = vmul.f32 1.0, %v667
      %v669 = vrcp.pop %v663
      %v670 = vmul.f32 1.0, %v669
      %v671 = vrcp.pop %v664
      %v672 = vmul.f32 1.0, %v671
      %v673 = vrcp.pop %v665
      %v674 = vmul.f32 1.0, %v673
      %v675 = vrcp.pop %v666
      %v676 = vmul.f32 1.0, %v675
      %v677 = vmul.f32 %v668, 1.0614054
      %v678 = vmul.f32 %v670, 1.0614054
      %v679 = vmul.f32 %v672, 1.0614054
      %v680 = vmul.f32 %v674, 1.0614054
      %v681 = vmul.f32 %v676, 1.0614054
      %v682 = vadd.f32 %v677, -1.4531521
      %v683 = vadd.f32 %v678, -1.4531521
      %v684 = vadd.f32 %v679, -1.4531521
      %v685 = vadd.f32 %v680, -1.4531521
      %v686 = vadd.f32 %v681, -1.4531521
      %v687 = vmul.f32 %v668, %v682
      %v688 = vmul.f32 %v670, %v683
      %v689 = vmul.f32 %v672, %v684
      %v690 = vmul.f32 %v674, %v685
      %v691 = vmul.f32 %v676, %v686
      %v692 = vadd.f32 %v687, 1.4214138
      %v693 = vadd.f32 %v688, 1.4214138
      %v694 = vadd.f32 %v689, 1.4214138
      %v695 = vadd.f32 %v690, 1.4214138
      %v696 = vadd.f32 %v691, 1.4214138
      %v697 = vmul.f32 %v668, %v692
      %v698 = vmul.f32 %v670, %v693
      %v699 = vmul.f32 %v672, %v694
      %v700 = vmul.f32 %v674, %v695
      %v701 = vmul.f32 %v676, %v696
      %v702 = vadd.f32 %v697, -0.28449672
      %v703 = vadd.f32 %v698, -0.28449672
      %v704 = vadd.f32 %v699, -0.28449672
      %v705 = vadd.f32 %v700, -0.28449672
      %v706 = vadd.f32 %v701, -0.28449672
      %v707 = vmul.f32 %v668, %v702
      %v708 = vmul.f32 %v670, %v703
      %v709 = vmul.f32 %v672, %v704
      %v710 = vmul.f32 %v674, %v705
      %v711 = vmul.f32 %v676, %v706
      %v712 = vadd.f32 %v707, 0.2548296
      %v713 = vadd.f32 %v708, 0.2548296
      %v714 = vadd.f32 %v709, 0.2548296
      %v715 = vadd.f32 %v710, 0.2548296
      %v716 = vadd.f32 %v711, 0.2548296
      %v717 = vmul.f32 %v668, %v712
      %v718 = vmul.f32 %v670, %v713
      %v719 = vmul.f32 %v672, %v714
      %v720 = vmul.f32 %v674, %v715
      %v721 = vmul.f32 %v676, %v716
      %v722 = vmul.f32 %v652, %v652
      %v723 = vmul.f32 %v653, %v653
      %v724 = vmul.f32 %v654, %v654
      %v725 = vmul.f32 %v655, %v655
      %v726 = vmul.f32 %v656, %v656
      %v727 = vsub.f32 0.0, %v722
      %v728 = vsub.f32 0.0, %v723
      %v729 = vsub.f32 0.0, %v724
      %v730 = vsub.f32 0.0, %v725
      %v731 = vsub.f32 0.0, %v726
      %v732 = vmul.f32 %v727, 1.442695
      %v733 = vpow.pop %v732
      %v734 = vmul.f32 %v728, 1.442695
      %v735 = vpow.pop %v734
      %v736 = vmul.f32 %v729, 1.442695
      %v737 = vpow.pop %v736
      %v738 = vmul.f32 %v730, 1.442695
      %v739 = vpow.pop %v738
      %v740 = vmul.f32 %v731, 1.442695
      %v741 = vpow.pop %v740
      %v742 = vmul.f32 %v717, %v733
      %v743 = vmul.f32 %v718, %v735
      %v744 = vmul.f32 %v719, %v737
      %v745 = vmul.f32 %v720, %v739
      %v746 = vmul.f32 %v721, %v741
      %v747 = vsub.f32 1.0, %v742
      %v748 = vsub.f32 1.0, %v743
      %v749 = vsub.f32 1.0, %v744
      %v750 = vsub.f32 1.0, %v745
      %v751 = vsub.f32 1.0, %v746
      %vm752 = vcmp.ge.f32.partialorder %v647, 0.0
      %vm753 = vcmp.ge.f32.partialorder %v648, 0.0
      %vm754 = vcmp.ge.f32.partialorder %v649, 0.0
      %vm755 = vcmp.ge.f32.partialorder %v650, 0.0
      %vm756 = vcmp.ge.f32.partialorder %v651, 0.0
      %v757 = vsub.f32 0.0, %v747
      %v758 = vsub.f32 0.0, %v748
      %v759 = vsub.f32 0.0, %v749
      %v760 = vsub.f32 0.0, %v750
      %v761 = vsub.f32 0.0, %v751
      %v762 = vsel %vm752, %v747, %v757
      %v763 = vsel %vm753, %v748, %v758
      %v764 = vsel %vm754, %v749, %v759
      %v765 = vsel %vm755, %v750, %v760
      %v766 = vsel %vm756, %v751, %v761
      %v767 = vmul.f32 %v502, 0.5
      %v768 = vmul.f32 %v504, 0.5
      %v769 = vmul.f32 %v573, 0.5
      %v770 = vmul.f32 %v575, 0.5
      %v771 = vmul.f32 %v644, 0.5
      %v772 = vadd.f32 %v762, 1.0
      %v773 = vadd.f32 %v763, 1.0
      %v774 = vadd.f32 %v764, 1.0
      %v775 = vadd.f32 %v765, 1.0
      %v776 = vadd.f32 %v766, 1.0
      %v777 = vmul.f32 %v767, %v772
      %v778 = vmul.f32 %v768, %v773
      %v779 = vmul.f32 %v769, %v774
      %v780 = vmul.f32 %v770, %v775
      %v781 = vmul.f32 %v771, %v776
      %782 = vst [vmem:[#allocation3] sm:$0xff] %v777
      %783 = vst [vmem:[#allocation3 + $0x8] sm:$0xff] %v778
      %784 = vst [vmem:[#allocation3 + $0x10] sm:$0xff] %v779
      %785 = vst [vmem:[#allocation3 + $0x18] sm:$0xff] %v780
      %vm786 = vcmask 261120
      %787 = vst.msk [vmem:[#allocation3 + $0x20] sm:$0xff] %vm786, %v781
      %788 = vst [vmem:[#allocation4] sm:$0xff] 0.0
      %789 = vst [vmem:[#allocation4 + $0x8] sm:$0xff] 0.0
      %790 = vst [vmem:[#allocation4 + $0x10] sm:$0xff] 0.0
      %791 = vst [vmem:[#allocation4 + $0x18] sm:$0xff] 0.0
      %vm792 = vcmask 1043456
      %vm793 = vcmask 310276
      %vm794 = vmor %vm793, %vm792
      %795 = vst.msk [vmem:[#allocation4 + $0x20] sm:$0xff] %vm794, 0.0
      %v796 = vld [vmem:[#allocation3] sm:$0xf]
      %798 = vrot.lane.b32.xlu0 %v796, 35
      %v799 = vpop.permute.xlu0 %798
      %vm801 = vcmask 544024
      %802 = vst.msk [vmem:[#allocation4] sm:$0xf] %vm801, %v799
      %v803 = vld [vmem:[#allocation3] sm:$0xf0]
      %v805 = vcombine.high %v803, %v803
      %806 = vrot.lane.b32.xlu0 %v805, 69
      %v807 = vpop.permute.xlu0 %806
      %vm809 = vcmask 822824
      %810 = vst.msk [vmem:[#allocation4] sm:$0xf] %vm809, %v807
      %v811 = vld [vmem:[#allocation3] sm:$0xf]
      %813 = vrot.lane.b32.xlu0 %v811, 69
      %v814 = vpop.permute.xlu0 %813
      %v815 = vrot.slane %v814, 4
      %vm816 = vcmask 564224
      %v817 = vsel %vm816, %v815, %v814
      %vm819 = vcmask 1044280
      %vm820 = vcmask 56324
      %vm821 = vmor %vm820, %vm819
      %822 = vst.msk [vmem:[#allocation4] sm:$0xff] %vm821, %v817
      %v823 = vld [vmem:[#allocation3] sm:$0xf0]
      %v825 = vcombine.high %v823, %v823
      %826 = vrot.lane.b32.xlu0 %v825, 103
      %v827 = vpop.permute.xlu0 %826
      %vm829 = vcmask 330824
      %830 = vst.msk [vmem:[#allocation4 + $0x4] sm:$0xf] %vm829, %v827
      %v831 = vld [vmem:[#allocation3] sm:$0xf]
      %833 = vrot.lane.b32.xlu0 %v831, 103
      %v834 = vpop.permute.xlu0 %833
      %vm836 = vcmask 609624
      %837 = vst.msk [vmem:[#allocation4 + $0x4] sm:$0xf] %vm836, %v834
      %v838 = vld [vmem:[#allocation3] sm:$0xf0]
      %v840 = vcombine.high %v838, %v838
      %841 = vrot.lane.b32.xlu0 %v840, 9
      %v842 = vpop.permute.xlu0 %841
      %vm844 = vcmask 888424
      %845 = vst.msk [vmem:[#allocation4 + $0x4] sm:$0xf] %vm844, %v842
      %v846 = vld [vmem:[#allocation3] sm:$0xf]
      %v847 = vld [vmem:[#allocation3 + $0x8] sm:$0xf]
      %v850 = vcombine.low %v846, %v847
      %851 = vrot.lane.b32.xlu0 %v850, 9
      %v852 = vpop.permute.xlu0 %851
      %v853 = vrot.slane %v852, 4
      %vm854 = vcmask 72704
      %v855 = vsel %vm854, %v853, %v852
      %vm857 = vcmask 1044344
      %vm858 = vcmask 121860
      %vm859 = vmor %vm858, %vm857
      %860 = vst.msk [vmem:[#allocation4 + $0x4] sm:$0xff] %vm859, %v855
      %v861 = vld [vmem:[#allocation3] sm:$0xf0]
      %v862 = vld [vmem:[#allocation3 + $0x8] sm:$0xf0]
      %v865 = vcombine.high %v861, %v862
      %866 = vrot.lane.b32.xlu0 %v865, 43
      %v867 = vpop.permute.xlu0 %866
      %v868 = vrot.slane %v867, 4
      %vm869 = vcmask 351232
      %v870 = vsel %vm869, %v867, %v868
      %vm872 = vcmask 396424
      %873 = vst.msk [vmem:[#allocation4 + $0x8] sm:$0xf] %vm872, %v870
      %v874 = vld [vmem:[#allocation3 + $0x8] sm:$0xf]
      %876 = vrot.lane.b32.xlu0 %v874, 43
      %v877 = vpop.permute.xlu0 %876
      %vm879 = vcmask 675224
      %880 = vst.msk [vmem:[#allocation4 + $0x8] sm:$0xf] %vm879, %v877
      %v881 = vld [vmem:[#allocation3 + $0x8] sm:$0xf0]
      %v883 = vcombine.high %v881, %v881
      %884 = vrot.lane.b32.xlu0 %v883, 77
      %v885 = vpop.permute.xlu0 %884
      %vm887 = vcmask 954024
      %888 = vst.msk [vmem:[#allocation4 + $0x8] sm:$0xf] %vm887, %v885
      %v889 = vld [vmem:[#allocation3 + $0x8] sm:$0xf]
      %891 = vrot.lane.b32.xlu0 %v889, 77
      %v892 = vpop.permute.xlu0 %891
      %v893 = vrot.slane %v892, 4
      %vm894 = vcmask 629760
      %v895 = vsel %vm894, %v893, %v892
      %vm897 = vcmask 1044408
      %vm898 = vcmask 187396
      %vm899 = vmor %vm898, %vm897
      %900 = vst.msk [vmem:[#allocation4 + $0x8] sm:$0xff] %vm899, %v895
      %v901 = vld [vmem:[#allocation3 + $0x8] sm:$0xf0]
      %v903 = vcombine.high %v901, %v901
      %904 = vrot.lane.b32.xlu0 %v903, 111
      %v905 = vpop.permute.xlu0 %904
      %vm907 = vcmask 462024
      %908 = vst.msk [vmem:[#allocation4 + $0xc] sm:$0xf] %vm907, %v905
      %v909 = vld [vmem:[#allocation3 + $0x8] sm:$0xf]
      %911 = vrot.lane.b32.xlu0 %v909, 111
      %v912 = vpop.permute.xlu0 %911
      %vm914 = vcmask 740824
      %915 = vst.msk [vmem:[#allocation4 + $0xc] sm:$0xf] %vm914, %v912
      %v916 = vld [vmem:[#allocation3 + $0x8] sm:$0xf0]
      %v918 = vcombine.high %v916, %v916
      %919 = vrot.lane.b32.xlu0 %v918, 17
      %v920 = vpop.permute.xlu0 %919
      %vm922 = vcmask 1019624
      %923 = vst.msk [vmem:[#allocation4 + $0xc] sm:$0xf] %vm922, %v920
      %v924 = vld [vmem:[#allocation3 + $0x8] sm:$0xf]
      %v925 = vld [vmem:[#allocation3 + $0x10] sm:$0xf]
      %v928 = vcombine.low %v924, %v925
      %929 = vrot.lane.b32.xlu0 %v928, 17
      %v930 = vpop.permute.xlu0 %929
      %v931 = vrot.slane %v930, 4
      %vm932 = vcmask 138240
      %v933 = vsel %vm932, %v931, %v930
      %vm935 = vcmask 1044472
      %vm936 = vcmask 252932
      %vm937 = vmor %vm936, %vm935
      %938 = vst.msk [vmem:[#allocation4 + $0xc] sm:$0xff] %vm937, %v933
      %v939 = vld [vmem:[#allocation3 + $0x8] sm:$0xf0]
      %v940 = vld [vmem:[#allocation3 + $0x10] sm:$0xf0]
      %v943 = vcombine.high %v939, %v940
      %944 = vrot.lane.b32.xlu0 %v943, 51
      %v945 = vpop.permute.xlu0 %944
      %v946 = vrot.slane %v945, 4
      %vm947 = vcmask 416768
      %v948 = vsel %vm947, %v945, %v946
      %vm950 = vcmask 527624
      %951 = vst.msk [vmem:[#allocation4 + $0x10] sm:$0xf] %vm950, %v948
      %v952 = vld [vmem:[#allocation3 + $0x10] sm:$0xf]
      %954 = vrot.lane.b32.xlu0 %v952, 51
      %v955 = vpop.permute.xlu0 %954
      %vm957 = vcmask 806424
      %958 = vst.msk [vmem:[#allocation4 + $0x10] sm:$0xf] %vm957, %v955
      %v959 = vld [vmem:[#allocation3 + $0x10] sm:$0xf0]
      %v961 = vcombine.high %v959, %v959
      %962 = vrot.lane.b32.xlu0 %v961, 85
      %v963 = vpop.permute.xlu0 %962
      %v964 = vrot.slane %v963, 4
      %vm965 = vcmask 695296
      %v966 = vsel %vm965, %v964, %v963
      %vm968 = vcmask 1044264
      %vm969 = vcmask 39940
      %vm970 = vmor %vm969, %vm968
      %971 = vst.msk [vmem:[#allocation4 + $0x10] sm:$0xff] %vm970, %v966
      %v972 = vld [vmem:[#allocation3 + $0x10] sm:$0xf]
      %974 = vrot.lane.b32.xlu0 %v972, 85
      %v975 = vpop.permute.xlu0 %974
      %vm977 = vcmask 314424
      %978 = vst.msk [vmem:[#allocation4 + $0x14] sm:$0xf] %vm977, %v975
      %v979 = vld [vmem:[#allocation3 + $0x10] sm:$0xf0]
      %v981 = vcombine.high %v979, %v979
      %982 = vrot.lane.b32.xlu0 %v981, 119
      %v983 = vpop.permute.xlu0 %982
      %vm985 = vcmask 593224
      %986 = vst.msk [vmem:[#allocation4 + $0x14] sm:$0xf] %vm985, %v983
      %v987 = vld [vmem:[#allocation3 + $0x10] sm:$0xf]
      %989 = vrot.lane.b32.xlu0 %v987, 119
      %v990 = vpop.permute.xlu0 %989
      %vm992 = vcmask 872024
      %993 = vst.msk [vmem:[#allocation4 + $0x14] sm:$0xf] %vm992, %v990
      %v994 = vld [vmem:[#allocation3 + $0x10] sm:$0xf0]
      %v996 = vcombine.high %v994, %v994
      %997 = vrot.lane.b32.xlu0 %v996, 25
      %v998 = vpop.permute.xlu0 %997
      %v999 = vrot.slane %v998, 4
      %vm1000 = vcmask 203776
      %v1001 = vsel %vm1000, %v999, %v998
      %vm1003 = vcmask 1044328
      %vm1004 = vcmask 105476
      %vm1005 = vmor %vm1004, %vm1003
      %1006 = vst.msk [vmem:[#allocation4 + $0x14] sm:$0xff] %vm1005, %v1001
      %v1007 = vld [vmem:[#allocation3 + $0x10] sm:$0xf]
      %v1008 = vld [vmem:[#allocation3 + $0x18] sm:$0xf]
      %v1011 = vcombine.low %v1007, %v1008
      %1012 = vrot.lane.b32.xlu0 %v1011, 25
      %v1013 = vpop.permute.xlu0 %1012
      %v1014 = vrot.slane %v1013, 4
      %v1015 = vsel %vm1000, %v1013, %v1014
      %vm1017 = vcmask 380024
      %1018 = vst.msk [vmem:[#allocation4 + $0x18] sm:$0xf] %vm1017, %v1015
      %v1019 = vld [vmem:[#allocation3 + $0x10] sm:$0xf0]
      %v1020 = vld [vmem:[#allocation3 + $0x18] sm:$0xf0]
      %v1023 = vcombine.high %v1019, %v1020
      %1024 = vrot.lane.b32.xlu0 %v1023, 59
      %v1025 = vpop.permute.xlu0 %1024
      %v1026 = vrot.slane %v1025, 4
      %vm1027 = vcmask 482304
      %v1028 = vsel %vm1027, %v1025, %v1026
      %vm1030 = vcmask 658824
      %1031 = vst.msk [vmem:[#allocation4 + $0x18] sm:$0xf] %vm1030, %v1028
      %v1032 = vld [vmem:[#allocation3 + $0x18] sm:$0xf]
      %1034 = vrot.lane.b32.xlu0 %v1032, 59
      %v1035 = vpop.permute.xlu0 %1034
      %vm1037 = vcmask 937624
      %1038 = vst.msk [vmem:[#allocation4 + $0x18] sm:$0xf] %vm1037, %v1035
      %v1039 = vld [vmem:[#allocation3 + $0x18] sm:$0xf0]
      %v1041 = vcombine.high %v1039, %v1039
      %1042 = vrot.lane.b32.xlu0 %v1041, 93
      %v1043 = vpop.permute.xlu0 %1042
      %v1044 = vrot.slane %v1043, 4
      %v1045 = vsel %vm360, %v1044, %v1043
      %vm1047 = vcmask 1044392
      %vm1048 = vcmask 171012
      %vm1049 = vmor %vm1048, %vm1047
      %1050 = vst.msk [vmem:[#allocation4 + $0x18] sm:$0xff] %vm1049, %v1045
      %v1051 = vld [vmem:[#allocation3 + $0x18] sm:$0xf]
      %1053 = vrot.lane.b32.xlu0 %v1051, 93
      %v1054 = vpop.permute.xlu0 %1053
      %vm1056 = vcmask 445624
      %1057 = vst.msk [vmem:[#allocation4 + $0x1c] sm:$0xf] %vm1056, %v1054
      %v1058 = vld [vmem:[#allocation3 + $0x18] sm:$0xf0]
      %v1060 = vcombine.high %v1058, %v1058
      %1061 = vrot.lane.b32.xlu0 %v1060, 127
      %v1062 = vpop.permute.xlu0 %1061
      %vm1064 = vcmask 724424
      %1065 = vst.msk [vmem:[#allocation4 + $0x1c] sm:$0xf] %vm1064, %v1062
      %v1066 = vld [vmem:[#allocation3 + $0x18] sm:$0xf]
      %1068 = vrot.lane.b32.xlu0 %v1066, 127
      %v1069 = vpop.permute.xlu0 %1068
      %vm1071 = vcmask 1003224
      %1072 = vst.msk [vmem:[#allocation4 + $0x1c] sm:$0xf] %vm1071, %v1069
      %v1073 = vld [vmem:[#allocation3 + $0x18] sm:$0xf0]
      %v1075 = vcombine.high %v1073, %v1073
      %1076 = vrot.lane.b32.xlu0 %v1075, 33
      %v1077 = vpop.permute.xlu0 %1076
      %v1078 = vrot.slane %v1077, 4
      %vm1079 = vcmask 269312
      %v1080 = vsel %vm1079, %v1078, %v1077
      %vm1082 = vcmask 1044456
      %vm1083 = vcmask 236548
      %vm1084 = vmor %vm1083, %vm1082
      %1085 = vst.msk [vmem:[#allocation4 + $0x1c] sm:$0xff] %vm1084, %v1080
      %v1086 = vld [vmem:[#allocation3 + $0x18] sm:$0xf]
      %v1087 = vld [vmem:[#allocation3 + $0x20] sm:$0xf]
      %v1090 = vcombine.low %v1086, %v1087
      %1091 = vrot.lane.b32.xlu0 %v1090, 33
      %v1092 = vpop.permute.xlu0 %1091
      %v1093 = vrot.slane %v1092, 4
      %v1094 = vsel %vm1079, %v1092, %v1093
      %vm1096 = vcmask 511224
      %1097 = vst.msk [vmem:[#allocation4 + $0x20] sm:$0xf] %vm1096, %v1094
      %v1098 = vld [vmem:[#allocation3 + $0x18] sm:$0xf0]
      %v1099 = vld [vmem:[#allocation3 + $0x20] sm:$0xf0]
      %v1102 = vcombine.high %v1098, %v1099
      %1103 = vrot.lane.b32.xlu0 %v1102, 67
      %v1104 = vpop.permute.xlu0 %1103
      %v1105 = vrot.slane %v1104, 4
      %vm1106 = vcmask 547840
      %v1107 = vsel %vm1106, %v1104, %v1105
      %vm1109 = vcmask 790024
      %1110 = vst.msk [vmem:[#allocation4 + $0x20] sm:$0xf] %vm1109, %v1107
      %v1111 = vld [vmem:[#allocation4] sm:$0xff]
      %v1112 = vld [vmem:[#allocation4 + $0x8] sm:$0xff]
      %v1113 = vld [vmem:[#allocation4 + $0x10] sm:$0xff]
      %v1114 = vld [vmem:[#allocation4 + $0x18] sm:$0xff]
      %v1115 = vld [vmem:[#allocation4 + $0x20] sm:$0xf]
      %v1120 = vcombine.high %v1111, %v1111
      %v1121 = vcombine.high %v1112, %v1112
      %v1122 = vcombine.high %v1113, %v1113
      %v1123 = vcombine.high %v1114, %v1114
      %1128 = vst [vmem:[#allocation5] sm:$0xf] %v1111
      %1129 = vst [vmem:[#allocation5 + $0x8] sm:$0xf] %v1120
      %1130 = vst [vmem:[#allocation5 + $0x10] sm:$0xf] %v1112
      %1131 = vst [vmem:[#allocation5 + $0x18] sm:$0xf] %v1121
      %1132 = vst [vmem:[#allocation5 + $0x20] sm:$0xf] %v1113
      %1133 = vst [vmem:[#allocation5 + $0x28] sm:$0xf] %v1122
      %1134 = vst [vmem:[#allocation5 + $0x30] sm:$0xf] %v1114
      %1135 = vst [vmem:[#allocation5 + $0x38] sm:$0xf] %v1123
      %vm1136 = vcmask 519168
      %1137 = vst.msk [vmem:[#allocation5 + $0x40] sm:$0xf] %vm1136, %v1115
      %v1138 = vld [vmem:[#allocation4] sm:$0xff]
      %v1139 = vld [vmem:[#allocation4 + $0x8] sm:$0xff]
      %v1140 = vld [vmem:[#allocation4 + $0x10] sm:$0xff]
      %v1141 = vld [vmem:[#allocation4 + $0x18] sm:$0xff]
      %v1142 = vld [vmem:[#allocation4 + $0x20] sm:$0xf]
      %v1148 = vcombine.low %v1138, %v1138
      %v1149 = vcombine.low %v1139, %v1139
      %v1150 = vcombine.low %v1140, %v1140
      %v1151 = vcombine.low %v1141, %v1141
      %v1152 = vcombine.low %v1142, %v1142
      %1153 = vrot.lane.b32.xlu0 %v1148, 127
      %v1154 = vpop.permute.xlu0 %1153
      %1155 = vrot.lane.b32.xlu0 %v1138, 127
      %v1156 = vpop.permute.xlu0 %1155
      %1157 = vrot.lane.b32.xlu0 %v1149, 127
      %v1158 = vpop.permute.xlu0 %1157
      %1159 = vrot.lane.b32.xlu0 %v1139, 127
      %v1160 = vpop.permute.xlu0 %1159
      %1161 = vrot.lane.b32.xlu0 %v1150, 127
      %v1162 = vpop.permute.xlu0 %1161
      %1163 = vrot.lane.b32.xlu0 %v1140, 127
      %v1164 = vpop.permute.xlu0 %1163
      %1165 = vrot.lane.b32.xlu0 %v1151, 127
      %v1166 = vpop.permute.xlu0 %1165
      %1167 = vrot.lane.b32.xlu0 %v1141, 127
      %v1168 = vpop.permute.xlu0 %1167
      %1169 = vrot.lane.b32.xlu0 %v1152, 127
      %v1170 = vpop.permute.xlu0 %1169
      %v1171 = vsel %vm259, %v1154, %v1156
      %v1172 = vsel %vm259, %v1156, %v1158
      %v1173 = vsel %vm259, %v1158, %v1160
      %v1174 = vsel %vm259, %v1160, %v1162
      %v1175 = vsel %vm259, %v1162, %v1164
      %v1176 = vsel %vm259, %v1164, %v1166
      %v1177 = vsel %vm259, %v1166, %v1168
      %v1178 = vsel %vm259, %v1168, %v1170
      %1188 = vst [vmem:[#allocation5] sm:$0xf0] %v1171
      %1189 = vst [vmem:[#allocation5 + $0x8] sm:$0xf0] %v1172
      %1190 = vst [vmem:[#allocation5 + $0x10] sm:$0xf0] %v1173
      %1191 = vst [vmem:[#allocation5 + $0x18] sm:$0xf0] %v1174
      %1192 = vst [vmem:[#allocation5 + $0x20] sm:$0xf0] %v1175
      %1193 = vst [vmem:[#allocation5 + $0x28] sm:$0xf0] %v1176
      %1194 = vst [vmem:[#allocation5 + $0x30] sm:$0xf0] %v1177
      %1195 = vst [vmem:[#allocation5 + $0x38] sm:$0xf0] %v1178
      %vm1196 = vcmask 523268
      %1197 = vst.msk [vmem:[#allocation5 + $0x40] sm:$0xf0] %vm1196, %v1170
      %v1198 = vld [vmem:[#allocation4] sm:$0xff]
      %v1199 = vld [vmem:[#allocation4 + $0x8] sm:$0xff]
      %v1200 = vld [vmem:[#allocation4 + $0x10] sm:$0xff]
      %v1201 = vld [vmem:[#allocation4 + $0x18] sm:$0xff]
      %v1202 = vld [vmem:[#allocation4 + $0x20] sm:$0xf]
      %v1208 = vcombine.high %v1198, %v1198
      %v1209 = vcombine.high %v1199, %v1199
      %v1210 = vcombine.high %v1200, %v1200
      %v1211 = vcombine.high %v1201, %v1201
      %1212 = vrot.lane.b32.xlu0 %v1198, 126
      %v1213 = vpop.permute.xlu0 %1212
      %1214 = vrot.lane.b32.xlu0 %v1208, 126
      %v1215 = vpop.permute.xlu0 %1214
      %1216 = vrot.lane.b32.xlu0 %v1199, 126
      %v1217 = vpop.permute.xlu0 %1216
      %1218 = vrot.lane.b32.xlu0 %v1209, 126
      %v1219 = vpop.permute.xlu0 %1218
      %1220 = vrot.lane.b32.xlu0 %v1200, 126
      %v1221 = vpop.permute.xlu0 %1220
      %1222 = vrot.lane.b32.xlu0 %v1210, 126
      %v1223 = vpop.permute.xlu0 %1222
      %1224 = vrot.lane.b32.xlu0 %v1201, 126
      %v1225 = vpop.permute.xlu0 %1224
      %1226 = vrot.lane.b32.xlu0 %v1211, 126
      %v1227 = vpop.permute.xlu0 %1226
      %1228 = vrot.lane.b32.xlu0 %v1202, 126
      %v1229 = vpop.permute.xlu0 %1228
      %v1230 = vsel %vm293, %v1213, %v1215
      %v1231 = vsel %vm293, %v1215, %v1217
      %v1232 = vsel %vm293, %v1217, %v1219
      %v1233 = vsel %vm293, %v1219, %v1221
      %v1234 = vsel %vm293, %v1221, %v1223
      %v1235 = vsel %vm293, %v1223, %v1225
      %v1236 = vsel %vm293, %v1225, %v1227
      %v1237 = vsel %vm293, %v1227, %v1229
      %1247 = vst [vmem:[#allocation5 + $0x48] sm:$0xf] %v1230
      %1248 = vst [vmem:[#allocation5 + $0x50] sm:$0xf] %v1231
      %1249 = vst [vmem:[#allocation5 + $0x58] sm:$0xf] %v1232
      %1250 = vst [vmem:[#allocation5 + $0x60] sm:$0xf] %v1233
      %1251 = vst [vmem:[#allocation5 + $0x68] sm:$0xf] %v1234
      %1252 = vst [vmem:[#allocation5 + $0x70] sm:$0xf] %v1235
      %1253 = vst [vmem:[#allocation5 + $0x78] sm:$0xf] %v1236
      %1254 = vst [vmem:[#allocation5 + $0x80] sm:$0xf] %v1237
      %1255 = vst.msk [vmem:[#allocation5 + $0x88] sm:$0xf] %vm1136, %v1229
      %v1256 = vld [vmem:[#allocation4] sm:$0xff]
      %v1257 = vld [vmem:[#allocation4 + $0x8] sm:$0xff]
      %v1258 = vld [vmem:[#allocation4 + $0x10] sm:$0xff]
      %v1259 = vld [vmem:[#allocation4 + $0x18] sm:$0xff]
      %v1260 = vld [vmem:[#allocation4 + $0x20] sm:$0xf]
      %v1266 = vcombine.low %v1256, %v1256
      %v1267 = vcombine.low %v1257, %v1257
      %v1268 = vcombine.low %v1258, %v1258
      %v1269 = vcombine.low %v1259, %v1259
      %v1270 = vcombine.low %v1260, %v1260
      %1271 = vrot.lane.b32.xlu0 %v1266, 94
      %v1272 = vpop.permute.xlu0 %1271
      %1273 = vrot.lane.b32.xlu0 %v1256, 94
      %v1274 = vpop.permute.xlu0 %1273
      %1275 = vrot.lane.b32.xlu0 %v1267, 94
      %v1276 = vpop.permute.xlu0 %1275
      %1277 = vrot.lane.b32.xlu0 %v1257, 94
      %v1278 = vpop.permute.xlu0 %1277
      %1279 = vrot.lane.b32.xlu0 %v1268, 94
      %v1280 = vpop.permute.xlu0 %1279
      %1281 = vrot.lane.b32.xlu0 %v1258, 94
      %v1282 = vpop.permute.xlu0 %1281
      %1283 = vrot.lane.b32.xlu0 %v1269, 94
      %v1284 = vpop.permute.xlu0 %1283
      %1285 = vrot.lane.b32.xlu0 %v1259, 94
      %v1286 = vpop.permute.xlu0 %1285
      %1287 = vrot.lane.b32.xlu0 %v1270, 94
      %v1288 = vpop.permute.xlu0 %1287
      %v1289 = vsel %vm327, %v1272, %v1274
      %v1290 = vsel %vm327, %v1274, %v1276
      %v1291 = vsel %vm327, %v1276, %v1278
      %v1292 = vsel %vm327, %v1278, %v1280
      %v1293 = vsel %vm327, %v1280, %v1282
      %v1294 = vsel %vm327, %v1282, %v1284
      %v1295 = vsel %vm327, %v1284, %v1286
      %v1296 = vsel %vm327, %v1286, %v1288
      %1306 = vst [vmem:[#allocation5 + $0x48] sm:$0xf0] %v1289
      %1307 = vst [vmem:[#allocation5 + $0x50] sm:$0xf0] %v1290
      %1308 = vst [vmem:[#allocation5 + $0x58] sm:$0xf0] %v1291
      %1309 = vst [vmem:[#allocation5 + $0x60] sm:$0xf0] %v1292
      %1310 = vst [vmem:[#allocation5 + $0x68] sm:$0xf0] %v1293
      %1311 = vst [vmem:[#allocation5 + $0x70] sm:$0xf0] %v1294
      %1312 = vst [vmem:[#allocation5 + $0x78] sm:$0xf0] %v1295
      %1313 = vst [vmem:[#allocation5 + $0x80] sm:$0xf0] %v1296
      %1314 = vst.msk [vmem:[#allocation5 + $0x88] sm:$0xf0] %vm1196, %v1288
      %v1315 = vld [vmem:[#allocation4] sm:$0xff]
      %v1316 = vld [vmem:[#allocation4 + $0x8] sm:$0xff]
      %v1317 = vld [vmem:[#allocation4 + $0x10] sm:$0xff]
      %v1318 = vld [vmem:[#allocation4 + $0x18] sm:$0xff]
      %v1319 = vld [vmem:[#allocation4 + $0x20] sm:$0xf]
      %v1325 = vcombine.high %v1315, %v1315
      %v1326 = vcombine.high %v1316, %v1316
      %v1327 = vcombine.high %v1317, %v1317
      %v1328 = vcombine.high %v1318, %v1318
      %1329 = vrot.lane.b32.xlu0 %v1315, 93
      %v1330 = vpop.permute.xlu0 %1329
      %1331 = vrot.lane.b32.xlu0 %v1325, 93
      %v1332 = vpop.permute.xlu0 %1331
      %1333 = vrot.lane.b32.xlu0 %v1316, 93
      %v1334 = vpop.permute.xlu0 %1333
      %1335 = vrot.lane.b32.xlu0 %v1326, 93
      %v1336 = vpop.permute.xlu0 %1335
      %1337 = vrot.lane.b32.xlu0 %v1317, 93
      %v1338 = vpop.permute.xlu0 %1337
      %1339 = vrot.lane.b32.xlu0 %v1327, 93
      %v1340 = vpop.permute.xlu0 %1339
      %1341 = vrot.lane.b32.xlu0 %v1318, 93
      %v1342 = vpop.permute.xlu0 %1341
      %1343 = vrot.lane.b32.xlu0 %v1328, 93
      %v1344 = vpop.permute.xlu0 %1343
      %1345 = vrot.lane.b32.xlu0 %v1319, 93
      %v1346 = vpop.permute.xlu0 %1345
      %v1347 = vsel %vm360, %v1330, %v1332
      %v1348 = vsel %vm360, %v1332, %v1334
      %v1349 = vsel %vm360, %v1334, %v1336
      %v1350 = vsel %vm360, %v1336, %v1338
      %v1351 = vsel %vm360, %v1338, %v1340
      %v1352 = vsel %vm360, %v1340, %v1342
      %v1353 = vsel %vm360, %v1342, %v1344
      %v1354 = vsel %vm360, %v1344, %v1346
      %1364 = vst [vmem:[#allocation5 + $0x90] sm:$0xf] %v1347
      %1365 = vst [vmem:[#allocation5 + $0x98] sm:$0xf] %v1348
      %1366 = vst [vmem:[#allocation5 + $0xa0] sm:$0xf] %v1349
      %1367 = vst [vmem:[#allocation5 + $0xa8] sm:$0xf] %v1350
      %1368 = vst [vmem:[#allocation5 + $0xb0] sm:$0xf] %v1351
      %1369 = vst [vmem:[#allocation5 + $0xb8] sm:$0xf] %v1352
      %1370 = vst [vmem:[#allocation5 + $0xc0] sm:$0xf] %v1353
      %1371 = vst [vmem:[#allocation5 + $0xc8] sm:$0xf] %v1354
      %1372 = vst.msk [vmem:[#allocation5 + $0xd0] sm:$0xf] %vm1136, %v1346
      %v1373 = vld [vmem:[#allocation4] sm:$0xff]
      %v1374 = vld [vmem:[#allocation4 + $0x8] sm:$0xff]
      %v1375 = vld [vmem:[#allocation4 + $0x10] sm:$0xff]
      %v1376 = vld [vmem:[#allocation4 + $0x18] sm:$0xff]
      %v1377 = vld [vmem:[#allocation4 + $0x20] sm:$0xf]
      %v1383 = vcombine.low %v1373, %v1373
      %v1384 = vcombine.low %v1374, %v1374
      %v1385 = vcombine.low %v1375, %v1375
      %v1386 = vcombine.low %v1376, %v1376
      %v1387 = vcombine.low %v1377, %v1377
      %1388 = vrot.lane.b32.xlu0 %v1383, 92
      %v1389 = vpop.permute.xlu0 %1388
      %1390 = vrot.lane.b32.xlu0 %v1373, 92
      %v1391 = vpop.permute.xlu0 %1390
      %1392 = vrot.lane.b32.xlu0 %v1384, 92
      %v1393 = vpop.permute.xlu0 %1392
      %1394 = vrot.lane.b32.xlu0 %v1374, 92
      %v1395 = vpop.permute.xlu0 %1394
      %1396 = vrot.lane.b32.xlu0 %v1385, 92
      %v1397 = vpop.permute.xlu0 %1396
      %1398 = vrot.lane.b32.xlu0 %v1375, 92
      %v1399 = vpop.permute.xlu0 %1398
      %1400 = vrot.lane.b32.xlu0 %v1386, 92
      %v1401 = vpop.permute.xlu0 %1400
      %1402 = vrot.lane.b32.xlu0 %v1376, 92
      %v1403 = vpop.permute.xlu0 %1402
      %1404 = vrot.lane.b32.xlu0 %v1387, 92
      %v1405 = vpop.permute.xlu0 %1404
      %v1406 = vsel %vm394, %v1389, %v1391
      %v1407 = vsel %vm394, %v1391, %v1393
      %v1408 = vsel %vm394, %v1393, %v1395
      %v1409 = vsel %vm394, %v1395, %v1397
      %v1410 = vsel %vm394, %v1397, %v1399
      %v1411 = vsel %vm394, %v1399, %v1401
      %v1412 = vsel %vm394, %v1401, %v1403
      %v1413 = vsel %vm394, %v1403, %v1405
      %1423 = vst [vmem:[#allocation5 + $0x90] sm:$0xf0] %v1406
      %1424 = vst [vmem:[#allocation5 + $0x98] sm:$0xf0] %v1407
      %1425 = vst [vmem:[#allocation5 + $0xa0] sm:$0xf0] %v1408
      %1426 = vst [vmem:[#allocation5 + $0xa8] sm:$0xf0] %v1409
      %1427 = vst [vmem:[#allocation5 + $0xb0] sm:$0xf0] %v1410
      %1428 = vst [vmem:[#allocation5 + $0xb8] sm:$0xf0] %v1411
      %1429 = vst [vmem:[#allocation5 + $0xc0] sm:$0xf0] %v1412
      %1430 = vst [vmem:[#allocation5 + $0xc8] sm:$0xf0] %v1413
      %1431 = vst.msk [vmem:[#allocation5 + $0xd0] sm:$0xf0] %vm1196, %v1405
      %v1432 = vld [vmem:[#allocation4] sm:$0xff]
      %v1433 = vld [vmem:[#allocation4 + $0x8] sm:$0xff]
      %v1434 = vld [vmem:[#allocation4 + $0x10] sm:$0xff]
      %v1435 = vld [vmem:[#allocation4 + $0x18] sm:$0xff]
      %v1436 = vld [vmem:[#allocation4 + $0x20] sm:$0xff]
      %v1442 = vcombine.high %v1432, %v1432
      %v1443 = vcombine.high %v1433, %v1433
      %v1444 = vcombine.high %v1434, %v1434
      %v1445 = vcombine.high %v1435, %v1435
      %v1446 = vcombine.high %v1436, %v1436
      %1447 = vrot.lane.b32.xlu0 %v1432, 60
      %v1448 = vpop.permute.xlu0 %1447
      %1449 = vrot.lane.b32.xlu0 %v1442, 60
      %v1450 = vpop.permute.xlu0 %1449
      %1451 = vrot.lane.b32.xlu0 %v1433, 60
      %v1452 = vpop.permute.xlu0 %1451
      %1453 = vrot.lane.b32.xlu0 %v1443, 60
      %v1454 = vpop.permute.xlu0 %1453
      %1455 = vrot.lane.b32.xlu0 %v1434, 60
      %v1456 = vpop.permute.xlu0 %1455
      %1457 = vrot.lane.b32.xlu0 %v1444, 60
      %v1458 = vpop.permute.xlu0 %1457
      %1459 = vrot.lane.b32.xlu0 %v1435, 60
      %v1460 = vpop.permute.xlu0 %1459
      %1461 = vrot.lane.b32.xlu0 %v1445, 60
      %v1462 = vpop.permute.xlu0 %1461
      %1463 = vrot.lane.b32.xlu0 %v1436, 60
      %v1464 = vpop.permute.xlu0 %1463
      %1465 = vrot.lane.b32.xlu0 %v1446, 60
      %v1466 = vpop.permute.xlu0 %1465
      %vm1467 = vcmask 490496
      %v1468 = vsel %vm1467, %v1448, %v1450
      %v1469 = vsel %vm1467, %v1450, %v1452
      %v1470 = vsel %vm1467, %v1452, %v1454
      %v1471 = vsel %vm1467, %v1454, %v1456
      %v1472 = vsel %vm1467, %v1456, %v1458
      %v1473 = vsel %vm1467, %v1458, %v1460
      %v1474 = vsel %vm1467, %v1460, %v1462
      %v1475 = vsel %vm1467, %v1462, %v1464
      %v1476 = vsel %vm1467, %v1464, %v1466
      %1486 = vst [vmem:[#allocation5 + $0xd8] sm:$0xf] %v1468
      %1487 = vst [vmem:[#allocation5 + $0xe0] sm:$0xf] %v1469
      %1488 = vst [vmem:[#allocation5 + $0xe8] sm:$0xf] %v1470
      %1489 = vst [vmem:[#allocation5 + $0xf0] sm:$0xf] %v1471
      %1490 = vst [vmem:[#allocation5 + $0xf8] sm:$0xf] %v1472
      %1491 = vst [vmem:[#allocation5 + $0x100] sm:$0xf] %v1473
      %1492 = vst [vmem:[#allocation5 + $0x108] sm:$0xf] %v1474
      %1493 = vst [vmem:[#allocation5 + $0x110] sm:$0xf] %v1475
      %1494 = vst.msk [vmem:[#allocation5 + $0x118] sm:$0xf] %vm1136, %v1476
      %v1495 = vld [vmem:[#allocation4] sm:$0xff]
      %v1496 = vld [vmem:[#allocation4 + $0x8] sm:$0xff]
      %v1497 = vld [vmem:[#allocation4 + $0x10] sm:$0xff]
      %v1498 = vld [vmem:[#allocation4 + $0x18] sm:$0xff]
      %v1499 = vld [vmem:[#allocation4 + $0x20] sm:$0xff]
      %v1505 = vcombine.low %v1495, %v1495
      %v1506 = vcombine.low %v1496, %v1496
      %v1507 = vcombine.low %v1497, %v1497
      %v1508 = vcombine.low %v1498, %v1498
      %v1509 = vcombine.low %v1499, %v1499
      %1510 = vrot.lane.b32.xlu0 %v1505, 59
      %v1511 = vpop.permute.xlu0 %1510
      %1512 = vrot.lane.b32.xlu0 %v1495, 59
      %v1513 = vpop.permute.xlu0 %1512
      %1514 = vrot.lane.b32.xlu0 %v1506, 59
      %v1515 = vpop.permute.xlu0 %1514
      %1516 = vrot.lane.b32.xlu0 %v1496, 59
      %v1517 = vpop.permute.xlu0 %1516
      %1518 = vrot.lane.b32.xlu0 %v1507, 59
      %v1519 = vpop.permute.xlu0 %1518
      %1520 = vrot.lane.b32.xlu0 %v1497, 59
      %v1521 = vpop.permute.xlu0 %1520
      %1522 = vrot.lane.b32.xlu0 %v1508, 59
      %v1523 = vpop.permute.xlu0 %1522
      %1524 = vrot.lane.b32.xlu0 %v1498, 59
      %v1525 = vpop.permute.xlu0 %1524
      %1526 = vrot.lane.b32.xlu0 %v1509, 59
      %v1527 = vpop.permute.xlu0 %1526
      %1528 = vrot.lane.b32.xlu0 %v1499, 59
      %v1529 = vpop.permute.xlu0 %1528
      %v1530 = vsel %vm1027, %v1511, %v1513
      %v1531 = vsel %vm1027, %v1513, %v1515
      %v1532 = vsel %vm1027, %v1515, %v1517
      %v1533 = vsel %vm1027, %v1517, %v1519
      %v1534 = vsel %vm1027, %v1519, %v1521
      %v1535 = vsel %vm1027, %v1521, %v1523
      %v1536 = vsel %vm1027, %v1523, %v1525
      %v1537 = vsel %vm1027, %v1525, %v1527
      %v1538 = vsel %vm1027, %v1527, %v1529
      %1548 = vst [vmem:[#allocation5 + $0xd8] sm:$0xf0] %v1530
      %1549 = vst [vmem:[#allocation5 + $0xe0] sm:$0xf0] %v1531
      %1550 = vst [vmem:[#allocation5 + $0xe8] sm:$0xf0] %v1532
      %1551 = vst [vmem:[#allocation5 + $0xf0] sm:$0xf0] %v1533
      %1552 = vst [vmem:[#allocation5 + $0xf8] sm:$0xf0] %v1534
      %1553 = vst [vmem:[#allocation5 + $0x100] sm:$0xf0] %v1535
      %1554 = vst [vmem:[#allocation5 + $0x108] sm:$0xf0] %v1536
      %1555 = vst [vmem:[#allocation5 + $0x110] sm:$0xf0] %v1537
      %1556 = vst.msk [vmem:[#allocation5 + $0x118] sm:$0xf0] %vm1196, %v1538
      %v1557 = vld [vmem:[#allocation4] sm:$0xff]
      %v1558 = vld [vmem:[#allocation4 + $0x8] sm:$0xff]
      %v1559 = vld [vmem:[#allocation4 + $0x10] sm:$0xff]
      %v1560 = vld [vmem:[#allocation4 + $0x18] sm:$0xff]
      %v1561 = vld [vmem:[#allocation4 + $0x20] sm:$0xff]
      %v1567 = vcombine.high %v1557, %v1557
      %v1568 = vcombine.high %v1558, %v1558
      %v1569 = vcombine.high %v1559, %v1559
      %v1570 = vcombine.high %v1560, %v1560
      %v1571 = vcombine.high %v1561, %v1561
      %1572 = vrot.lane.b32.xlu0 %v1557, 58
      %v1573 = vpop.permute.xlu0 %1572
      %1574 = vrot.lane.b32.xlu0 %v1567, 58
      %v1575 = vpop.permute.xlu0 %1574
      %1576 = vrot.lane.b32.xlu0 %v1558, 58
      %v1577 = vpop.permute.xlu0 %1576
      %1578 = vrot.lane.b32.xlu0 %v1568, 58
      %v1579 = vpop.permute.xlu0 %1578
      %1580 = vrot.lane.b32.xlu0 %v1559, 58
      %v1581 = vpop.permute.xlu0 %1580
      %1582 = vrot.lane.b32.xlu0 %v1569, 58
      %v1583 = vpop.permute.xlu0 %1582
      %1584 = vrot.lane.b32.xlu0 %v1560, 58
      %v1585 = vpop.permute.xlu0 %1584
      %1586 = vrot.lane.b32.xlu0 %v1570, 58
      %v1587 = vpop.permute.xlu0 %1586
      %1588 = vrot.lane.b32.xlu0 %v1561, 58
      %v1589 = vpop.permute.xlu0 %1588
      %1590 = vrot.lane.b32.xlu0 %v1571, 58
      %v1591 = vpop.permute.xlu0 %1590
      %vm1592 = vcmask 474112
      %v1593 = vsel %vm1592, %v1573, %v1575
      %v1594 = vsel %vm1592, %v1575, %v1577
      %v1595 = vsel %vm1592, %v1577, %v1579
      %v1596 = vsel %vm1592, %v1579, %v1581
      %v1597 = vsel %vm1592, %v1581, %v1583
      %v1598 = vsel %vm1592, %v1583, %v1585
      %v1599 = vsel %vm1592, %v1585, %v1587
      %v1600 = vsel %vm1592, %v1587, %v1589
      %v1601 = vsel %vm1592, %v1589, %v1591
      %1611 = vst [vmem:[#allocation5 + $0x120] sm:$0xf] %v1593
      %1612 = vst [vmem:[#allocation5 + $0x128] sm:$0xf] %v1594
      %1613 = vst [vmem:[#allocation5 + $0x130] sm:$0xf] %v1595
      %1614 = vst [vmem:[#allocation5 + $0x138] sm:$0xf] %v1596
      %1615 = vst [vmem:[#allocation5 + $0x140] sm:$0xf] %v1597
      %1616 = vst [vmem:[#allocation5 + $0x148] sm:$0xf] %v1598
      %1617 = vst [vmem:[#allocation5 + $0x150] sm:$0xf] %v1599
      %1618 = vst [vmem:[#allocation5 + $0x158] sm:$0xf] %v1600
      %1619 = vst.msk [vmem:[#allocation5 + $0x160] sm:$0xf] %vm1136, %v1601
      %v1620 = vld [vmem:[%s3] sm:$0xff]
      %v1621 = vld [vmem:[#allocation5] sm:$0xff]
      %v1622 = vld [vmem:[#allocation5 + $0x8] sm:$0xff]
      %v1623 = vld [vmem:[#allocation5 + $0x10] sm:$0xff]
      %v1624 = vld [vmem:[#allocation5 + $0x18] sm:$0xff]
      %v1625 = vld [vmem:[#allocation5 + $0x20] sm:$0xff]
      %v1626 = vld [vmem:[#allocation5 + $0x28] sm:$0xff]
      %v1627 = vld [vmem:[#allocation5 + $0x30] sm:$0xff]
      %v1628 = vld [vmem:[#allocation5 + $0x38] sm:$0xff]
      %v1629 = vld [vmem:[#allocation5 + $0x40] sm:$0xff]
      %v1630 = vld [vmem:[#allocation5 + $0x48] sm:$0xff]
      %v1631 = vld [vmem:[#allocation5 + $0x50] sm:$0xff]
      %v1632 = vld [vmem:[#allocation5 + $0x58] sm:$0xff]
      %v1633 = vld [vmem:[#allocation5 + $0x60] sm:$0xff]
      %v1634 = vld [vmem:[#allocation5 + $0x68] sm:$0xff]
      %v1635 = vld [vmem:[#allocation5 + $0x70] sm:$0xff]
      %v1636 = vld [vmem:[#allocation5 + $0x78] sm:$0xff]
      %v1637 = vld [vmem:[#allocation5 + $0x80] sm:$0xff]
      %v1638 = vld [vmem:[#allocation5 + $0x88] sm:$0xff]
      %v1639 = vld [vmem:[#allocation5 + $0x90] sm:$0xff]
      %v1640 = vld [vmem:[#allocation5 + $0x98] sm:$0xff]
      %v1641 = vld [vmem:[#allocation5 + $0xa0] sm:$0xff]
      %v1642 = vld [vmem:[#allocation5 + $0xa8] sm:$0xff]
      %v1643 = vld [vmem:[#allocation5 + $0xb0] sm:$0xff]
      %v1644 = vld [vmem:[#allocation5 + $0xb8] sm:$0xff]
      %v1645 = vld [vmem:[#allocation5 + $0xc0] sm:$0xff]
      %v1646 = vld [vmem:[#allocation5 + $0xc8] sm:$0xff]
      %v1647 = vld [vmem:[#allocation5 + $0xd0] sm:$0xff]
      %v1648 = vld [vmem:[#allocation5 + $0xd8] sm:$0xff]
      %v1649 = vld [vmem:[#allocation5 + $0xe0] sm:$0xff]
      %v1650 = vld [vmem:[#allocation5 + $0xe8] sm:$0xff]
      %v1651 = vld [vmem:[#allocation5 + $0xf0] sm:$0xff]
      %v1652 = vld [vmem:[#allocation5 + $0xf8] sm:$0xff]
      %v1653 = vld [vmem:[#allocation5 + $0x100] sm:$0xff]
      %v1654 = vld [vmem:[#allocation5 + $0x108] sm:$0xff]
      %v1655 = vld [vmem:[#allocation5 + $0x110] sm:$0xff]
      %v1656 = vld [vmem:[#allocation5 + $0x118] sm:$0xff]
      %v1657 = vld [vmem:[#allocation5 + $0x120] sm:$0xf]
      %v1658 = vld [vmem:[#allocation5 + $0x128] sm:$0xf]
      %v1659 = vld [vmem:[#allocation5 + $0x130] sm:$0xf]
      %v1660 = vld [vmem:[#allocation5 + $0x138] sm:$0xf]
      %v1661 = vld [vmem:[#allocation5 + $0x140] sm:$0xf]
      %v1662 = vld [vmem:[#allocation5 + $0x148] sm:$0xf]
      %v1663 = vld [vmem:[#allocation5 + $0x150] sm:$0xf]
      %v1664 = vld [vmem:[#allocation5 + $0x158] sm:$0xf]
      %v1665 = vld [vmem:[#allocation5 + $0x160] sm:$0xf]
      %v1666 = vld [vmem:[%s4] sm:$0xff]
      %1668 = vset.pattern.permute.xlu0 0
      %1669 = vperm.xlu0 %1668, %v1666
      %v1670 = vpop.permute.xlu0 %1669
      %vm1672 = vcmask 293888
      %v1674 = vsel %vm1672, %v1620, 0
      %v1677 = vsel %vm792, %v1657, 0
      %v1680 = vsel %vm792, %v1658, 0
      %v1683 = vsel %vm792, %v1659, 0
      %v1686 = vsel %vm792, %v1660, 0
      %v1689 = vsel %vm792, %v1661, 0
      %v1692 = vsel %vm792, %v1662, 0
      %v1695 = vsel %vm792, %v1663, 0
      %v1698 = vsel %vm792, %v1664, 0
      %v1701 = vsel %vm792, %v1665, 0
      %1703 = vmatprep.subr.mxu0 %v1622
      %1704 = vmatpush1.msra.mxu0 %v1621
      %1705 = vmatprep.subr.mxu0 %v1631
      %1706 = vmatpush1.msra.mxu0 %v1630
      %1707 = vmatprep.subr.mxu0 %v1640
      %1708 = vmatpush1.msra.mxu0 %v1639
      %1709 = vmatprep.subr.mxu0 %v1649
      %1710 = vmatpush1.msra.mxu0 %v1648
      %1711 = vmatprep.subr.mxu0 %v1680
      %1712 = vmatpush1.msra.mxu0 %v1677
      %1713 = vmatprep.subr.mxu0 0.0
      %1714 = vmatpush1.msra.mxu0 0.0
      %1715 = vmatprep.subr.mxu0 0.0
      %1716 = vmatpush1.msra.mxu0 0.0
      %1717 = vmatprep.subr.mxu0 0.0
      %1718 = vmatpush1.msra.mxu0 0.0
      %1719 = vmatprep.subr.mxu0 0.0
      %1720 = vmatpush1.msra.mxu0 0.0
      %1721 = vmatprep.subr.mxu0 0.0
      %1722 = vmatpush1.msra.mxu0 0.0
      %1723 = vmatprep.subr.mxu0 0.0
      %1724 = vmatpush1.msra.mxu0 0.0
      %1725 = vmatprep.subr.mxu0 0.0
      %1726 = vmatpush1.msra.mxu0 0.0
      %1727 = vmatprep.subr.mxu0 0.0
      %1728 = vmatpush1.msra.mxu0 0.0
      %1729 = vmatprep.subr.mxu0 0.0
      %1730 = vmatpush1.msra.mxu0 0.0
      %1731 = vmatprep.subr.mxu0 0.0
      %1732 = vmatpush1.msra.mxu0 0.0
      %1733 = vmatprep.subr.mxu0 0.0
      %1734 = vmatpush1.msra.mxu0 0.0
      %1735 = vmatprep.subr.mxu0 0.0
      %1736 = vmatpush1.msra.mxu0 0.0
      %1737 = vmatprep.subr.mxu0 0.0
      %1738 = vmatpush1.msra.mxu0 0.0
      %1739 = vmatprep.subr.mxu0 0.0
      %1740 = vmatpush1.msra.mxu0 0.0
      %1741 = vmatprep.subr.mxu0 0.0
      %1742 = vmatpush1.msra.mxu0 0.0
      %1743 = vmatprep.subr.mxu0 0.0
      %1744 = vmatpush1.msra.mxu0 0.0
      %1745 = vmatprep.subr.mxu0 0.0
      %1746 = vmatpush1.msra.mxu0 0.0
      %1747 = vmatprep.subr.mxu0 0.0
      %1748 = vmatpush1.msra.mxu0 0.0
      %1749 = vmatprep.subr.mxu0 0.0
      %1750 = vmatpush1.msra.mxu0 0.0
      %1751 = vmatprep.subr.mxu0 0.0
      %1752 = vmatpush1.msra.mxu0 0.0
      %1753 = vmatprep.subr.mxu0 0.0
      %1754 = vmatpush1.msra.mxu0 0.0
      %1755 = vmatprep.subr.mxu0 0.0
      %1756 = vmatpush1.msra.mxu0 0.0
      %1757 = vmatprep.subr.mxu0 0.0
      %1758 = vmatpush1.msra.mxu0 0.0
      %1759 = vmatprep.subr.mxu0 0.0
      %1760 = vmatpush1.msra.mxu0 0.0
      %1761 = vmatprep.subr.mxu0 0.0
      %1762 = vmatpush1.msra.mxu0 0.0
      %1763 = vmatprep.subr.mxu0 0.0
      %1764 = vmatpush1.msra.mxu0 0.0
      %1765 = vmatprep.subr.mxu0 0.0
      %1766 = vmatpush1.msra.mxu0 0.0
      %1767 = vmatprep.mubr.f32.mxu0 0.0
      %1768 = vmatmul.mubr.f32.gmra.mrb[0].mxu0 %v1674
      %v1769 = vpop.f32.mrb[0].mxu0
      %v1770 = vadd.f32 %v1670, %v1769
      %v1771 = vpop.f32.mrb[0].mxu0
      %v1772 = vadd.f32 %v1670, %v1771
      %1773 = vdwg.mxu0
      %1774 = vmatprep.subr.mxu0 %v1624
      %1775 = vmatpush1.msra.mxu0 %v1623
      %1776 = vmatprep.subr.mxu0 %v1633
      %1777 = vmatpush1.msra.mxu0 %v1632
      %1778 = vmatprep.subr.mxu0 %v1642
      %1779 = vmatpush1.msra.mxu0 %v1641
      %1780 = vmatprep.subr.mxu0 %v1651
      %1781 = vmatpush1.msra.mxu0 %v1650
      %1782 = vmatprep.subr.mxu0 %v1686
      %1783 = vmatpush1.msra.mxu0 %v1683
      %1784 = vmatprep.subr.mxu0 0.0
      %1785 = vmatpush1.msra.mxu0 0.0
      %1786 = vmatprep.subr.mxu0 0.0
      %1787 = vmatpush1.msra.mxu0 0.0
      %1788 = vmatprep.subr.mxu0 0.0
      %1789 = vmatpush1.msra.mxu0 0.0
      %1790 = vmatprep.subr.mxu0 0.0
      %1791 = vmatpush1.msra.mxu0 0.0
      %1792 = vmatprep.subr.mxu0 0.0
      %1793 = vmatpush1.msra.mxu0 0.0
      %1794 = vmatprep.subr.mxu0 0.0
      %1795 = vmatpush1.msra.mxu0 0.0
      %1796 = vmatprep.subr.mxu0 0.0
      %1797 = vmatpush1.msra.mxu0 0.0
      %1798 = vmatprep.subr.mxu0 0.0
      %1799 = vmatpush1.msra.mxu0 0.0
      %1800 = vmatprep.subr.mxu0 0.0
      %1801 = vmatpush1.msra.mxu0 0.0
      %1802 = vmatprep.subr.mxu0 0.0
      %1803 = vmatpush1.msra.mxu0 0.0
      %1804 = vmatprep.subr.mxu0 0.0
      %1805 = vmatpush1.msra.mxu0 0.0
      %1806 = vmatprep.subr.mxu0 0.0
      %1807 = vmatpush1.msra.mxu0 0.0
      %1808 = vmatprep.subr.mxu0 0.0
      %1809 = vmatpush1.msra.mxu0 0.0
      %1810 = vmatprep.subr.mxu0 0.0
      %1811 = vmatpush1.msra.mxu0 0.0
      %1812 = vmatprep.subr.mxu0 0.0
      %1813 = vmatpush1.msra.mxu0 0.0
      %1814 = vmatprep.subr.mxu0 0.0
      %1815 = vmatpush1.msra.mxu0 0.0
      %1816 = vmatprep.subr.mxu0 0.0
      %1817 = vmatpush1.msra.mxu0 0.0
      %1818 = vmatprep.subr.mxu0 0.0
      %1819 = vmatpush1.msra.mxu0 0.0
      %1820 = vmatprep.subr.mxu0 0.0
      %1821 = vmatpush1.msra.mxu0 0.0
      %1822 = vmatprep.subr.mxu0 0.0
      %1823 = vmatpush1.msra.mxu0 0.0
      %1824 = vmatprep.subr.mxu0 0.0
      %1825 = vmatpush1.msra.mxu0 0.0
      %1826 = vmatprep.subr.mxu0 0.0
      %1827 = vmatpush1.msra.mxu0 0.0
      %1828 = vmatprep.subr.mxu0 0.0
      %1829 = vmatpush1.msra.mxu0 0.0
      %1830 = vmatprep.subr.mxu0 0.0
      %1831 = vmatpush1.msra.mxu0 0.0
      %1832 = vmatprep.subr.mxu0 0.0
      %1833 = vmatpush1.msra.mxu0 0.0
      %1834 = vmatprep.subr.mxu0 0.0
      %1835 = vmatpush1.msra.mxu0 0.0
      %1836 = vmatprep.subr.mxu0 0.0
      %1837 = vmatpush1.msra.mxu0 0.0
      %1838 = vmatprep.mubr.f32.mxu0 0.0
      %1839 = vmatmul.mubr.f32.gmra.mrb[0].mxu0 %v1674
      %v1840 = vpop.f32.mrb[0].mxu0
      %v1841 = vadd.f32 %v1670, %v1840
      %v1842 = vpop.f32.mrb[0].mxu0
      %v1843 = vadd.f32 %v1670, %v1842
      %1844 = vdwg.mxu0
      %1845 = vmatprep.subr.mxu0 %v1626
      %1846 = vmatpush1.msra.mxu0 %v1625
      %1847 = vmatprep.subr.mxu0 %v1635
      %1848 = vmatpush1.msra.mxu0 %v1634
      %1849 = vmatprep.subr.mxu0 %v1644
      %1850 = vmatpush1.msra.mxu0 %v1643
      %1851 = vmatprep.subr.mxu0 %v1653
      %1852 = vmatpush1.msra.mxu0 %v1652
      %1853 = vmatprep.subr.mxu0 %v1692
      %1854 = vmatpush1.msra.mxu0 %v1689
      %1855 = vmatprep.subr.mxu0 0.0
      %1856 = vmatpush1.msra.mxu0 0.0
      %1857 = vmatprep.subr.mxu0 0.0
      %1858 = vmatpush1.msra.mxu0 0.0
      %1859 = vmatprep.subr.mxu0 0.0
      %1860 = vmatpush1.msra.mxu0 0.0
      %1861 = vmatprep.subr.mxu0 0.0
      %1862 = vmatpush1.msra.mxu0 0.0
      %1863 = vmatprep.subr.mxu0 0.0
      %1864 = vmatpush1.msra.mxu0 0.0
      %1865 = vmatprep.subr.mxu0 0.0
      %1866 = vmatpush1.msra.mxu0 0.0
      %1867 = vmatprep.subr.mxu0 0.0
      %1868 = vmatpush1.msra.mxu0 0.0
      %1869 = vmatprep.subr.mxu0 0.0
      %1870 = vmatpush1.msra.mxu0 0.0
      %1871 = vmatprep.subr.mxu0 0.0
      %1872 = vmatpush1.msra.mxu0 0.0
      %1873 = vmatprep.subr.mxu0 0.0
      %1874 = vmatpush1.msra.mxu0 0.0
      %1875 = vmatprep.subr.mxu0 0.0
      %1876 = vmatpush1.msra.mxu0 0.0
      %1877 = vmatprep.subr.mxu0 0.0
      %1878 = vmatpush1.msra.mxu0 0.0
      %1879 = vmatprep.subr.mxu0 0.0
      %1880 = vmatpush1.msra.mxu0 0.0
      %1881 = vmatprep.subr.mxu0 0.0
      %1882 = vmatpush1.msra.mxu0 0.0
      %1883 = vmatprep.subr.mxu0 0.0
      %1884 = vmatpush1.msra.mxu0 0.0
      %1885 = vmatprep.subr.mxu0 0.0
      %1886 = vmatpush1.msra.mxu0 0.0
      %1887 = vmatprep.subr.mxu0 0.0
      %1888 = vmatpush1.msra.mxu0 0.0
      %1889 = vmatprep.subr.mxu0 0.0
      %1890 = vmatpush1.msra.mxu0 0.0
      %1891 = vmatprep.subr.mxu0 0.0
      %1892 = vmatpush1.msra.mxu0 0.0
      %1893 = vmatprep.subr.mxu0 0.0
      %1894 = vmatpush1.msra.mxu0 0.0
      %1895 = vmatprep.subr.mxu0 0.0
      %1896 = vmatpush1.msra.mxu0 0.0
      %1897 = vmatprep.subr.mxu0 0.0
      %1898 = vmatpush1.msra.mxu0 0.0
      %1899 = vmatprep.subr.mxu0 0.0
      %1900 = vmatpush1.msra.mxu0 0.0
      %1901 = vmatprep.subr.mxu0 0.0
      %1902 = vmatpush1.msra.mxu0 0.0
      %1903 = vmatprep.subr.mxu0 0.0
      %1904 = vmatpush1.msra.mxu0 0.0
      %1905 = vmatprep.subr.mxu0 0.0
      %1906 = vmatpush1.msra.mxu0 0.0
      %1907 = vmatprep.subr.mxu0 0.0
      %1908 = vmatpush1.msra.mxu0 0.0
      %1909 = vmatprep.mubr.f32.mxu0 0.0
      %1910 = vmatmul.mubr.f32.gmra.mrb[0].mxu0 %v1674
      %v1911 = vpop.f32.mrb[0].mxu0
      %v1912 = vadd.f32 %v1670, %v1911
      %v1913 = vpop.f32.mrb[0].mxu0
      %v1914 = vadd.f32 %v1670, %v1913
      %1915 = vdwg.mxu0
      %1916 = vmatprep.subr.mxu0 %v1628
      %1917 = vmatpush1.msra.mxu0 %v1627
      %1918 = vmatprep.subr.mxu0 %v1637
      %1919 = vmatpush1.msra.mxu0 %v1636
      %1920 = vmatprep.subr.mxu0 %v1646
      %1921 = vmatpush1.msra.mxu0 %v1645
      %1922 = vmatprep.subr.mxu0 %v1655
      %1923 = vmatpush1.msra.mxu0 %v1654
      %1924 = vmatprep.subr.mxu0 %v1698
      %1925 = vmatpush1.msra.mxu0 %v1695
      %1926 = vmatprep.subr.mxu0 0.0
      %1927 = vmatpush1.msra.mxu0 0.0
      %1928 = vmatprep.subr.mxu0 0.0
      %1929 = vmatpush1.msra.mxu0 0.0
      %1930 = vmatprep.subr.mxu0 0.0
      %1931 = vmatpush1.msra.mxu0 0.0
      %1932 = vmatprep.subr.mxu0 0.0
      %1933 = vmatpush1.msra.mxu0 0.0
      %1934 = vmatprep.subr.mxu0 0.0
      %1935 = vmatpush1.msra.mxu0 0.0
      %1936 = vmatprep.subr.mxu0 0.0
      %1937 = vmatpush1.msra.mxu0 0.0
      %1938 = vmatprep.subr.mxu0 0.0
      %1939 = vmatpush1.msra.mxu0 0.0
      %1940 = vmatprep.subr.mxu0 0.0
      %1941 = vmatpush1.msra.mxu0 0.0
      %1942 = vmatprep.subr.mxu0 0.0
      %1943 = vmatpush1.msra.mxu0 0.0
      %1944 = vmatprep.subr.mxu0 0.0
      %1945 = vmatpush1.msra.mxu0 0.0
      %1946 = vmatprep.subr.mxu0 0.0
      %1947 = vmatpush1.msra.mxu0 0.0
      %1948 = vmatprep.subr.mxu0 0.0
      %1949 = vmatpush1.msra.mxu0 0.0
      %1950 = vmatprep.subr.mxu0 0.0
      %1951 = vmatpush1.msra.mxu0 0.0
      %1952 = vmatprep.subr.mxu0 0.0
      %1953 = vmatpush1.msra.mxu0 0.0
      %1954 = vmatprep.subr.mxu0 0.0
      %1955 = vmatpush1.msra.mxu0 0.0
      %1956 = vmatprep.subr.mxu0 0.0
      %1957 = vmatpush1.msra.mxu0 0.0
      %1958 = vmatprep.subr.mxu0 0.0
      %1959 = vmatpush1.msra.mxu0 0.0
      %1960 = vmatprep.subr.mxu0 0.0
      %1961 = vmatpush1.msra.mxu0 0.0
      %1962 = vmatprep.subr.mxu0 0.0
      %1963 = vmatpush1.msra.mxu0 0.0
      %1964 = vmatprep.subr.mxu0 0.0
      %1965 = vmatpush1.msra.mxu0 0.0
      %1966 = vmatprep.subr.mxu0 0.0
      %1967 = vmatpush1.msra.mxu0 0.0
      %1968 = vmatprep.subr.mxu0 0.0
      %1969 = vmatpush1.msra.mxu0 0.0
      %1970 = vmatprep.subr.mxu0 0.0
      %1971 = vmatpush1.msra.mxu0 0.0
      %1972 = vmatprep.subr.mxu0 0.0
      %1973 = vmatpush1.msra.mxu0 0.0
      %1974 = vmatprep.subr.mxu0 0.0
      %1975 = vmatpush1.msra.mxu0 0.0
      %1976 = vmatprep.subr.mxu0 0.0
      %1977 = vmatpush1.msra.mxu0 0.0
      %1978 = vmatprep.subr.mxu0 0.0
      %1979 = vmatpush1.msra.mxu0 0.0
      %1980 = vmatprep.mubr.f32.mxu0 0.0
      %1981 = vmatmul.mubr.f32.gmra.mrb[0].mxu0 %v1674
      %v1982 = vpop.f32.mrb[0].mxu0
      %v1983 = vadd.f32 %v1670, %v1982
      %v1984 = vpop.f32.mrb[0].mxu0
      %v1985 = vadd.f32 %v1670, %v1984
      %1986 = vdwg.mxu0
      %1987 = vmatprep.subr.mxu0 0.0
      %1988 = vmatpush1.msra.mxu0 %v1629
      %1989 = vmatprep.subr.mxu0 0.0
      %1990 = vmatpush1.msra.mxu0 %v1638
      %1991 = vmatprep.subr.mxu0 0.0
      %1992 = vmatpush1.msra.mxu0 %v1647
      %1993 = vmatprep.subr.mxu0 0.0
      %1994 = vmatpush1.msra.mxu0 %v1656
      %1995 = vmatprep.subr.mxu0 0.0
      %1996 = vmatpush1.msra.mxu0 %v1701
      %1997 = vmatprep.subr.mxu0 0.0
      %1998 = vmatpush1.msra.mxu0 0.0
      %1999 = vmatprep.subr.mxu0 0.0
      %2000 = vmatpush1.msra.mxu0 0.0
      %2001 = vmatprep.subr.mxu0 0.0
      %2002 = vmatpush1.msra.mxu0 0.0
      %2003 = vmatprep.subr.mxu0 0.0
      %2004 = vmatpush1.msra.mxu0 0.0
      %2005 = vmatprep.subr.mxu0 0.0
      %2006 = vmatpush1.msra.mxu0 0.0
      %2007 = vmatprep.subr.mxu0 0.0
      %2008 = vmatpush1.msra.mxu0 0.0
      %2009 = vmatprep.subr.mxu0 0.0
      %2010 = vmatpush1.msra.mxu0 0.0
      %2011 = vmatprep.subr.mxu0 0.0
      %2012 = vmatpush1.msra.mxu0 0.0
      %2013 = vmatprep.subr.mxu0 0.0
      %2014 = vmatpush1.msra.mxu0 0.0
      %2015 = vmatprep.subr.mxu0 0.0
      %2016 = vmatpush1.msra.mxu0 0.0
      %2017 = vmatprep.subr.mxu0 0.0
      %2018 = vmatpush1.msra.mxu0 0.0
      %2019 = vmatprep.subr.mxu0 0.0
      %2020 = vmatpush1.msra.mxu0 0.0
      %2021 = vmatprep.subr.mxu0 0.0
      %2022 = vmatpush1.msra.mxu0 0.0
      %2023 = vmatprep.subr.mxu0 0.0
      %2024 = vmatpush1.msra.mxu0 0.0
      %2025 = vmatprep.subr.mxu0 0.0
      %2026 = vmatpush1.msra.mxu0 0.0
      %2027 = vmatprep.subr.mxu0 0.0
      %2028 = vmatpush1.msra.mxu0 0.0
      %2029 = vmatprep.subr.mxu0 0.0
      %2030 = vmatpush1.msra.mxu0 0.0
      %2031 = vmatprep.subr.mxu0 0.0
      %2032 = vmatpush1.msra.mxu0 0.0
      %2033 = vmatprep.subr.mxu0 0.0
      %2034 = vmatpush1.msra.mxu0 0.0
      %2035 = vmatprep.subr.mxu0 0.0
      %2036 = vmatpush1.msra.mxu0 0.0
      %2037 = vmatprep.subr.mxu0 0.0
      %2038 = vmatpush1.msra.mxu0 0.0
      %2039 = vmatprep.subr.mxu0 0.0
      %2040 = vmatpush1.msra.mxu0 0.0
      %2041 = vmatprep.subr.mxu0 0.0
      %2042 = vmatpush1.msra.mxu0 0.0
      %2043 = vmatprep.subr.mxu0 0.0
      %2044 = vmatpush1.msra.mxu0 0.0
      %2045 = vmatprep.subr.mxu0 0.0
      %2046 = vmatpush1.msra.mxu0 0.0
      %2047 = vmatprep.subr.mxu0 0.0
      %2048 = vmatpush1.msra.mxu0 0.0
      %2049 = vmatprep.subr.mxu0 0.0
      %2050 = vmatpush1.msra.mxu0 0.0
      %2051 = vmatprep.mubr.f32.mxu0 0.0
      %2052 = vmatmul.mubr.f32.gmra.mrb[0].mxu0 %v1674
      %v2053 = vpop.f32.mrb[0].mxu0
      %v2054 = vadd.f32 %v1670, %v2053
      %v2055 = vpop.f32.mrb[0].mxu0
      %2056 = vdwg.mxu0
      %v2057 = vmul.f32 %v1770, 0.70710677
      %v2058 = vmul.f32 %v1772, 0.70710677
      %v2059 = vmul.f32 %v1841, 0.70710677
      %v2060 = vmul.f32 %v1843, 0.70710677
      %v2061 = vmul.f32 %v1912, 0.70710677
      %v2062 = vmul.f32 %v1914, 0.70710677
      %v2063 = vmul.f32 %v1983, 0.70710677
      %v2064 = vmul.f32 %v1985, 0.70710677
      %v2065 = vmul.f32 %v2054, 0.70710677
      %v2066 = vand.u32 2147483647, %v2057
      %v2067 = vand.u32 2147483647, %v2058
      %v2068 = vand.u32 2147483647, %v2059
      %v2069 = vand.u32 2147483647, %v2060
      %v2070 = vand.u32 2147483647, %v2061
      %v2071 = vand.u32 2147483647, %v2062
      %v2072 = vand.u32 2147483647, %v2063
      %v2073 = vand.u32 2147483647, %v2064
      %v2074 = vand.u32 2147483647, %v2065
      %v2075 = vmul.f32 %v2066, 0.3275911
      %v2076 = vmul.f32 %v2067, 0.3275911
      %v2077 = vmul.f32 %v2068, 0.3275911
      %v2078 = vmul.f32 %v2069, 0.3275911
      %v2079 = vmul.f32 %v2070, 0.3275911
      %v2080 = vmul.f32 %v2071, 0.3275911
      %v2081 = vmul.f32 %v2072, 0.3275911
      %v2082 = vmul.f32 %v2073, 0.3275911
      %v2083 = vmul.f32 %v2074, 0.3275911
      %v2084 = vadd.f32 %v2075, 1.0
      %v2085 = vadd.f32 %v2076, 1.0
      %v2086 = vadd.f32 %v2077, 1.0
      %v2087 = vadd.f32 %v2078, 1.0
      %v2088 = vadd.f32 %v2079, 1.0
      %v2089 = vadd.f32 %v2080, 1.0
      %v2090 = vadd.f32 %v2081, 1.0
      %v2091 = vadd.f32 %v2082, 1.0
      %v2092 = vadd.f32 %v2083, 1.0
      %v2093 = vrcp.pop %v2084
      %v2094 = vmul.f32 1.0, %v2093
      %v2095 = vrcp.pop %v2085
      %v2096 = vmul.f32 1.0, %v2095
      %v2097 = vrcp.pop %v2086
      %v2098 = vmul.f32 1.0, %v2097
      %v2099 = vrcp.pop %v2087
      %v2100 = vmul.f32 1.0, %v2099
      %v2101 = vrcp.pop %v2088
      %v2102 = vmul.f32 1.0, %v2101
      %v2103 = vrcp.pop %v2089
      %v2104 = vmul.f32 1.0, %v2103
      %v2105 = vrcp.pop %v2090
      %v2106 = vmul.f32 1.0, %v2105
      %v2107 = vrcp.pop %v2091
      %v2108 = vmul.f32 1.0, %v2107
      %v2109 = vrcp.pop %v2092
      %v2110 = vmul.f32 1.0, %v2109
      %v2111 = vmul.f32 %v2094, 1.0614054
      %v2112 = vmul.f32 %v2096, 1.0614054
      %v2113 = vmul.f32 %v2098, 1.0614054
      %v2114 = vmul.f32 %v2100, 1.0614054
      %v2115 = vmul.f32 %v2102, 1.0614054
      %v2116 = vmul.f32 %v2104, 1.0614054
      %v2117 = vmul.f32 %v2106, 1.0614054
      %v2118 = vmul.f32 %v2108, 1.0614054
      %v2119 = vmul.f32 %v2110, 1.0614054
      %v2120 = vadd.f32 %v2111, -1.4531521
      %v2121 = vadd.f32 %v2112, -1.4531521
      %v2122 = vadd.f32 %v2113, -1.4531521
      %v2123 = vadd.f32 %v2114, -1.4531521
      %v2124 = vadd.f32 %v2115, -1.4531521
      %v2125 = vadd.f32 %v2116, -1.4531521
      %v2126 = vadd.f32 %v2117, -1.4531521
      %v2127 = vadd.f32 %v2118, -1.4531521
      %v2128 = vadd.f32 %v2119, -1.4531521
      %v2129 = vmul.f32 %v2094, %v2120
      %v2130 = vmul.f32 %v2096, %v2121
      %v2131 = vmul.f32 %v2098, %v2122
      %v2132 = vmul.f32 %v2100, %v2123
      %v2133 = vmul.f32 %v2102, %v2124
      %v2134 = vmul.f32 %v2104, %v2125
      %v2135 = vmul.f32 %v2106, %v2126
      %v2136 = vmul.f32 %v2108, %v2127
      %v2137 = vmul.f32 %v2110, %v2128
      %v2138 = vadd.f32 %v2129, 1.4214138
      %v2139 = vadd.f32 %v2130, 1.4214138
      %v2140 = vadd.f32 %v2131, 1.4214138
      %v2141 = vadd.f32 %v2132, 1.4214138
      %v2142 = vadd.f32 %v2133, 1.4214138
      %v2143 = vadd.f32 %v2134, 1.4214138
      %v2144 = vadd.f32 %v2135, 1.4214138
      %v2145 = vadd.f32 %v2136, 1.4214138
      %v2146 = vadd.f32 %v2137, 1.4214138
      %v2147 = vmul.f32 %v2094, %v2138
      %v2148 = vmul.f32 %v2096, %v2139
      %v2149 = vmul.f32 %v2098, %v2140
      %v2150 = vmul.f32 %v2100, %v2141
      %v2151 = vmul.f32 %v2102, %v2142
      %v2152 = vmul.f32 %v2104, %v2143
      %v2153 = vmul.f32 %v2106, %v2144
      %v2154 = vmul.f32 %v2108, %v2145
      %v2155 = vmul.f32 %v2110, %v2146
      %v2156 = vadd.f32 %v2147, -0.28449672
      %v2157 = vadd.f32 %v2148, -0.28449672
      %v2158 = vadd.f32 %v2149, -0.28449672
      %v2159 = vadd.f32 %v2150, -0.28449672
      %v2160 = vadd.f32 %v2151, -0.28449672
      %v2161 = vadd.f32 %v2152, -0.28449672
      %v2162 = vadd.f32 %v2153, -0.28449672
      %v2163 = vadd.f32 %v2154, -0.28449672
      %v2164 = vadd.f32 %v2155, -0.28449672
      %v2165 = vmul.f32 %v2094, %v2156
      %v2166 = vmul.f32 %v2096, %v2157
      %v2167 = vmul.f32 %v2098, %v2158
      %v2168 = vmul.f32 %v2100, %v2159
      %v2169 = vmul.f32 %v2102, %v2160
      %v2170 = vmul.f32 %v2104, %v2161
      %v2171 = vmul.f32 %v2106, %v2162
      %v2172 = vmul.f32 %v2108, %v2163
      %v2173 = vmul.f32 %v2110, %v2164
      %v2174 = vadd.f32 %v2165, 0.2548296
      %v2175 = vadd.f32 %v2166, 0.2548296
      %v2176 = vadd.f32 %v2167, 0.2548296
      %v2177 = vadd.f32 %v2168, 0.2548296
      %v2178 = vadd.f32 %v2169, 0.2548296
      %v2179 = vadd.f32 %v2170, 0.2548296
      %v2180 = vadd.f32 %v2171, 0.2548296
      %v2181 = vadd.f32 %v2172, 0.2548296
      %v2182 = vadd.f32 %v2173, 0.2548296
      %v2183 = vmul.f32 %v2094, %v2174
      %v2184 = vmul.f32 %v2096, %v2175
      %v2185 = vmul.f32 %v2098, %v2176
      %v2186 = vmul.f32 %v2100, %v2177
      %v2187 = vmul.f32 %v2102, %v2178
      %v2188 = vmul.f32 %v2104, %v2179
      %v2189 = vmul.f32 %v2106, %v2180
      %v2190 = vmul.f32 %v2108, %v2181
      %v2191 = vmul.f32 %v2110, %v2182
      %v2192 = vmul.f32 %v2066, %v2066
      %v2193 = vmul.f32 %v2067, %v2067
      %v2194 = vmul.f32 %v2068, %v2068
      %v2195 = vmul.f32 %v2069, %v2069
      %v2196 = vmul.f32 %v2070, %v2070
      %v2197 = vmul.f32 %v2071, %v2071
      %v2198 = vmul.f32 %v2072, %v2072
      %v2199 = vmul.f32 %v2073, %v2073
      %v2200 = vmul.f32 %v2074, %v2074
      %v2201 = vsub.f32 0.0, %v2192
      %v2202 = vsub.f32 0.0, %v2193
      %v2203 = vsub.f32 0.0, %v2194
      %v2204 = vsub.f32 0.0, %v2195
      %v2205 = vsub.f32 0.0, %v2196
      %v2206 = vsub.f32 0.0, %v2197
      %v2207 = vsub.f32 0.0, %v2198
      %v2208 = vsub.f32 0.0, %v2199
      %v2209 = vsub.f32 0.0, %v2200
      %v2210 = vmul.f32 %v2201, 1.442695
      %v2211 = vpow.pop %v2210
      %v2212 = vmul.f32 %v2202, 1.442695
      %v2213 = vpow.pop %v2212
      %v2214 = vmul.f32 %v2203, 1.442695
      %v2215 = vpow.pop %v2214
      %v2216 = vmul.f32 %v2204, 1.442695
      %v2217 = vpow.pop %v2216
      %v2218 = vmul.f32 %v2205, 1.442695
      %v2219 = vpow.pop %v2218
      %v2220 = vmul.f32 %v2206, 1.442695
      %v2221 = vpow.pop %v2220
      %v2222 = vmul.f32 %v2207, 1.442695
      %v2223 = vpow.pop %v2222
      %v2224 = vmul.f32 %v2208, 1.442695
      %v2225 = vpow.pop %v2224
      %v2226 = vmul.f32 %v2209, 1.442695
      %v2227 = vpow.pop %v2226
      %v2228 = vmul.f32 %v2183, %v2211
      %v2229 = vmul.f32 %v2184, %v2213
      %v2230 = vmul.f32 %v2185, %v2215
      %v2231 = vmul.f32 %v2186, %v2217
      %v2232 = vmul.f32 %v2187, %v2219
      %v2233 = vmul.f32 %v2188, %v2221
      %v2234 = vmul.f32 %v2189, %v2223
      %v2235 = vmul.f32 %v2190, %v2225
      %v2236 = vmul.f32 %v2191, %v2227
      %v2237 = vsub.f32 1.0, %v2228
      %v2238 = vsub.f32 1.0, %v2229
      %v2239 = vsub.f32 1.0, %v2230
      %v2240 = vsub.f32 1.0, %v2231
      %v2241 = vsub.f32 1.0, %v2232
      %v2242 = vsub.f32 1.0, %v2233
      %v2243 = vsub.f32 1.0, %v2234
      %v2244 = vsub.f32 1.0, %v2235
      %v2245 = vsub.f32 1.0, %v2236
      %vm2246 = vcmp.ge.f32.partialorder %v2057, 0.0
      %vm2247 = vcmp.ge.f32.partialorder %v2058, 0.0
      %vm2248 = vcmp.ge.f32.partialorder %v2059, 0.0
      %vm2249 = vcmp.ge.f32.partialorder %v2060, 0.0
      %vm2250 = vcmp.ge.f32.partialorder %v2061, 0.0
      %vm2251 = vcmp.ge.f32.partialorder %v2062, 0.0
      %vm2252 = vcmp.ge.f32.partialorder %v2063, 0.0
      %vm2253 = vcmp.ge.f32.partialorder %v2064, 0.0
      %vm2254 = vcmp.ge.f32.partialorder %v2065, 0.0
      %v2255 = vsub.f32 0.0, %v2237
      %v2256 = vsub.f32 0.0, %v2238
      %v2257 = vsub.f32 0.0, %v2239
      %v2258 = vsub.f32 0.0, %v2240
      %v2259 = vsub.f32 0.0, %v2241
      %v2260 = vsub.f32 0.0, %v2242
      %v2261 = vsub.f32 0.0, %v2243
      %v2262 = vsub.f32 0.0, %v2244
      %v2263 = vsub.f32 0.0, %v2245
      %v2264 = vsel %vm2246, %v2237, %v2255
      %v2265 = vsel %vm2247, %v2238, %v2256
      %v2266 = vsel %vm2248, %v2239, %v2257
      %v2267 = vsel %vm2249, %v2240, %v2258
      %v2268 = vsel %vm2250, %v2241, %v2259
      %v2269 = vsel %vm2251, %v2242, %v2260
      %v2270 = vsel %vm2252, %v2243, %v2261
      %v2271 = vsel %vm2253, %v2244, %v2262
      %v2272 = vsel %vm2254, %v2245, %v2263
      %v2273 = vmul.f32 %v1770, 0.5
      %v2274 = vmul.f32 %v1772, 0.5
      %v2275 = vmul.f32 %v1841, 0.5
      %v2276 = vmul.f32 %v1843, 0.5
      %v2277 = vmul.f32 %v1912, 0.5
      %v2278 = vmul.f32 %v1914, 0.5
      %v2279 = vmul.f32 %v1983, 0.5
      %v2280 = vmul.f32 %v1985, 0.5
      %v2281 = vmul.f32 %v2054, 0.5
      %v2282 = vadd.f32 %v2264, 1.0
      %v2283 = vadd.f32 %v2265, 1.0
      %v2284 = vadd.f32 %v2266, 1.0
      %v2285 = vadd.f32 %v2267, 1.0
      %v2286 = vadd.f32 %v2268, 1.0
      %v2287 = vadd.f32 %v2269, 1.0
      %v2288 = vadd.f32 %v2270, 1.0
      %v2289 = vadd.f32 %v2271, 1.0
      %v2290 = vadd.f32 %v2272, 1.0
      %v2291 = vmul.f32 %v2273, %v2282
      %v2292 = vmul.f32 %v2274, %v2283
      %v2293 = vmul.f32 %v2275, %v2284
      %v2294 = vmul.f32 %v2276, %v2285
      %v2295 = vmul.f32 %v2277, %v2286
      %v2296 = vmul.f32 %v2278, %v2287
      %v2297 = vmul.f32 %v2279, %v2288
      %v2298 = vmul.f32 %v2280, %v2289
      %v2299 = vmul.f32 %v2281, %v2290
      %2300 = vst [vmem:[%s224] sm:$0xff] %v2291
      %2301 = vst [vmem:[%s224 + $0x8] sm:$0xff] %v2292
      %2302 = vst [vmem:[%s224 + $0x10] sm:$0xff] %v2293
      %2303 = vst [vmem:[%s224 + $0x18] sm:$0xff] %v2294
      %2304 = vst [vmem:[%s224 + $0x20] sm:$0xff] %v2295
      %2305 = vst [vmem:[%s224 + $0x28] sm:$0xff] %v2296
      %2306 = vst [vmem:[%s224 + $0x30] sm:$0xff] %v2297
      %2307 = vst [vmem:[%s224 + $0x38] sm:$0xff] %v2298
      %vm2308 = vcmask 523264
      %2309 = vst.msk [vmem:[%s224 + $0x40] sm:$0xff] %vm2308, %v2299
      %p2310 = scmp.lt.s32.totalorder %s16, 1
      %s2311 = scalar_select %p2310, %s16, 1
      %s2312 = smul.addr %s2311, 9
      %s2313 = smul.addr %s2312, 8
      %s2314 = scalar_lea.vmem %s5, %s2313
      // Predicated region
      $region41: #{upconv_forward.1} parent=39 // pred_check
        %p2315 = pneg %p144
      $region42: #{upconv_forward.1} parent=39 // pred_check_branch
        %2317 = sbr.rel (%p2315) target = $region44
      $region43: #{upconv_forward.1} parent=39 // pred_region
        _
      $region44: #{upconv_forward.1} parent=39 // pred_fallthru
        _
    $region40: #{upconv_forward.1} parent=5 // pred_fallthru
      _
    %p2318 = scmp.le.s32.totalorder 2, %s11
    // Predicated region
    $region45: #{upconv_forward.1} parent=5 // pred_check
      %p2319 = pneg %p2318
    $region46: #{upconv_forward.1} parent=5 // pred_check_branch
      %2321 = sbr.rel (%p2319) target = $region48
    $region47: #{upconv_forward.1} parent=5 // pred_region
      %s2322 = ssub.s32 %s11, 2
      // Predicated region
      $region49: #{upconv_forward.1} parent=47 // pred_check
        %p2323 = pneg %p150
      $region50: #{upconv_forward.1} parent=47 // pred_check_branch
        %2325 = sbr.rel (%p2323) target = $region52
      $region51: #{upconv_forward.1} parent=47 // pred_region
        %p2326 = scmp.lt.s32.totalorder %s17, 1
        %s2327 = scalar_select %p2326, %s17, 1
        %s2328 = smul.addr %s2327, 9
        %s2329 = smul.addr %s2328, 8
        %s2330 = scalar_lea.vmem %s5, %s2329
      $region52: #{upconv_forward.1} parent=47 // pred_fallthru
        _
    $region48: #{upconv_forward.1} parent=5 // pred_fallthru
      _
  $region6: #{upconv_forward.1} parent=0 // loop_footer
    %s15 = sadd.s32 1, %s11
  $region7: #{upconv_forward.1} parent=0 // loop_footer_branch
    %10 = sbr.rel target = $region3
  $region8: #{upconv_forward.1} parent=0 // loop_exit
    _

</llo_original>
